<compile_context>
chip_gen: v5e
topology: v5e:2x2
jax: 0.10.0
libtpu: 0.0.40
codegen_flags: <defaults>
</compile_context>

<pallas_src>
import jax
import jax.numpy as jnp
from jax import lax
from jax.experimental import pallas as pl
from jax.experimental.pallas import tpu as pltpu

POOL_SIZES = (5, 9, 13)
_P = max(POOL_SIZES) // 2  # = 6 (W-halo of the padded input / H-halo of r5)


def _min_value(dtype):
    """Identity element for max, dtype-aware (review correctness note)."""
    dtype = jnp.dtype(dtype)
    if jnp.issubdtype(dtype, jnp.floating):
        return jnp.asarray(-jnp.inf, dtype)
    if jnp.issubdtype(dtype, jnp.integer):
        return jnp.asarray(jnp.iinfo(dtype).min, dtype)
    raise TypeError(f"SPP max-pool padding undefined for dtype {dtype}")


def _spp_kernel(x_ref, out_ref, pad_ref, r5_ref, p5_ref):
    """SPP for pool sizes (5, 9, 13) on one (C-block, n) tile, NHWC layout.

    x_ref:   (1, H, W, Cb)      C on the 128-lane axis
    out_ref: (1, 4, H, W, Cb)   slots = [pool13, pool9, pool5, identity]
    pad_ref: (H,    W+12, Cb)   x with -inf W-padding only (H real rows only)
    r5_ref:  (H+12, W+8,  Cb)   window-5 running max along W, -inf H strips
    p5_ref:  (H+8,  W+8,  Cb)   5x5 max pool with +/-4 halo in H and W
    """
    _, H, W, Cb = x_ref.shape
    dt = x_ref.dtype
    neg = _min_value(dt)
    P = _P

    # One-time constant -inf init of regions that are read but never written
    # by the per-step code.  Grid = (C-blocks [parallel], N [arbitrary]):
    # every core's first iteration has program_id(1) == 0, so this is
    # megacore-safe; scratch persists across grid iterations.
    @pl.when(pl.program_id(1) == 0)
    def _init():
        pad_ref[:, 0:P, :] = jnp.full((H, P, Cb), neg, dt)
        pad_ref[:, P + W:, :] = jnp.full((H, P, Cb), neg, dt)
        r5_ref[0:P, :, :] = jnp.full((P, W + 8, Cb), neg, dt)
        r5_ref[P + H:, :, :] = jnp.full((P, W + 8, Cb), neg, dt)

    x = x_ref[0]                                            # (H, W, Cb)
    pad_ref[:, P:P + W, :] = x

    # ---- row stage: window-5 running max along W (log-doubling, real rows
    # only; the all--inf pad rows are represented by r5's -inf strips). -----
    m2 = jnp.maximum(pad_ref[:, 0:W + 10, :], pad_ref[:, 1:W + 11, :])
    m4 = jnp.maximum(m2[:, 0:W + 8, :], m2[:, 2:W + 10, :])
    r5_ref[P:P + H, :, :] = jnp.maximum(m4, pad_ref[:, 4:W + 12, :])

    # ---- column stage: window-5 running max along H (log-doubling; offsets
    # are on the outer dim, so value slices here are free vreg selects). ----
    c2 = jnp.maximum(r5_ref[0:H + 10, :, :], r5_ref[1:H + 11, :, :])
    c4 = jnp.maximum(c2[0:H + 8], c2[2:H + 10])
    p5_ref[...] = jnp.maximum(c4, r5_ref[4:H + 12, :, :])
    # p5_ref[a, b] = 5x5 max pool of x centered at (a - 4, b - 4).

    # ---- 5x5 output: centered slice read back from VMEM (offset vld). -----
    out_ref[0, 2, :, :, :] = p5_ref[4:4 + H, 4:4 + W, :]

    # ---- 9x9 = max of 2x2 taps of the 5x5 pool at offsets (+/-2, +/-2). ---
    m9 = jnp.maximum(p5_ref[2:2 + H, 2:2 + W, :], p5_ref[2:2 + H, 6:6 + W, :])
    m9 = jnp.maximum(m9, p5_ref[6:6 + H, 2:2 + W, :])
    m9 = jnp.maximum(m9, p5_ref[6:6 + H, 6:6 + W, :])
    out_ref[0, 1, :, :, :] = m9

    # ---- 13x13 = max of 3x3 taps of the 5x5 pool at offsets {-4, 0, +4};
    # direct taps avoid a 9x9 VMEM round-trip (stores are the scarce slot). -
    m13 = p5_ref[0:H, 0:W, :]
    for a in (0, 4, 8):
        for b in (0, 4, 8):
            if a == 0 and b == 0:
                continue
            m13 = jnp.maximum(m13, p5_ref[a:a + H, b:b + W, :])
    out_ref[0, 0, :, :, :] = m13

    # ---- identity branch (the module's concat requires a copy of x; the
    # kernel is the cheapest place to produce those output bytes). ----------
    out_ref[0, 3, :, :, :] = x


# --------------------------- wrapper / tiling --------------------------------

def _round_up(v, m):
    return ((v + m - 1) // m) * m


def _vmem_bytes_estimate(H, W, cb, itemsize):
    """VMEM use: double-buffered in/out blocks + the three scratch buffers."""
    r8 = lambda v: _round_up(v, 8)          # sublane padding of the 2nd-minor dim
    per_lane_block = (
        2 * 1 * H * r8(W)                   # input block  (double-buffered)
        + 2 * 4 * H * r8(W)                 # output block (double-buffered)
        + H * r8(W + 2 * _P)                # pad_ref
        + (H + 2 * _P) * r8(W + 8)          # r5_ref
        + (H + 8) * r8(W + 8)               # p5_ref
    )
    return per_lane_block * cb * itemsize


def _vmem_capacity_bytes():
    try:
        return int(pltpu.get_tpu_info().vmem_capacity_bytes)
    except Exception:
        return 64 * 1024 * 1024             # v7x-safe fallback


def _choose_cb(N, Cp, H, W, itemsize, budget):
    """Channel block: largest tile that fits VMEM *and* leaves >=4 grid steps
    (so both v7x TensorCores get pipelined work); otherwise maximize steps."""
    fitting = [cb for cb in (512, 256, 128)
               if Cp % cb == 0 and _vmem_bytes_estimate(H, W, cb, itemsize) <= budget]
    if not fitting:
        # TODO(synk): add an H-tiling grid axis with a 6-row halo for feature
        # maps too large for a single (H, W, 128) tile on v7x VMEM.
        return 128
    for cb in fitting:                       # descending: prefer large tiles
        if N * (Cp // cb) >= 4:
            return cb
    return fitting[-1]                       # smallest fitting -> most steps


def spp_nhwc(x_nhwc):
    """Core SPP, no layout transposes.  x: (N, H, W, C) ->
    (N, 4, H, W, C) with slots [pool13, pool9, pool5, identity].
    NHWC end-to-end networks should call this directly (zero extra HBM
    traffic beyond 1 read + 4 writes of the activation)."""
    N, H, W, C = x_nhwc.shape
    itemsize = jnp.dtype(x_nhwc.dtype).itemsize

    # Lane-dense stores: pad C up to a multiple of 128 (padded channels are
    # pooled independently and sliced away afterwards).
    Cp = _round_up(C, 128)
    if Cp != C:
        x_nhwc = jnp.pad(x_nhwc, ((0, 0), (0, 0), (0, 0), (0, Cp - C)))

    cap = _vmem_capacity_bytes()
    cb = _choose_cb(N, Cp, H, W, itemsize, budget=int(0.7 * cap))
    n_cb = Cp // cb
    est = _vmem_bytes_estimate(H, W, cb, itemsize)
    vmem_limit = max(16 << 20, min(int(est * 1.25) + (4 << 20), int(0.9 * cap)))

    out = pl.pallas_call(
        _spp_kernel,
        out_shape=jax.ShapeDtypeStruct((N, 4, H, W, Cp), x_nhwc.dtype),
        grid_spec=pltpu.PrefetchScalarGridSpec(
            num_scalar_prefetch=0,
            # C-blocks on the parallel (outer) axis so megacore can split
            # them even when N == 1; N is the inner "arbitrary" axis, which
            # makes the pl.when(program_id(1)==0) init hoist megacore-safe.
            grid=(n_cb, N),
            in_specs=[
                pl.BlockSpec((1, H, W, cb), lambda c, n: (n, 0, 0, c)),
            ],
            out_specs=pl.BlockSpec((1, 4, H, W, cb),
                                   lambda c, n: (n, 0, 0, 0, c)),
            scratch_shapes=[
                pltpu.VMEM((H, W + 2 * _P, cb), x_nhwc.dtype),        # pad
                pltpu.VMEM((H + 2 * _P, W + 8, cb), x_nhwc.dtype),    # r5
                pltpu.VMEM((H + 8, W + 8, cb), x_nhwc.dtype),         # p5
            ],
        ),
        compiler_params=pltpu.CompilerParams(
            dimension_semantics=("parallel", "arbitrary"),
            vmem_limit_bytes=vmem_limit,
        ),
    )(x_nhwc)

    if Cp != C:
        out = out[..., :C]
    return out


def spp(x, pool_sizes=POOL_SIZES):
    """PyTorch-compatible SPP.  x: (N, C, H, W) -> (N, 4*C, H, W), NCHW."""
    assert tuple(pool_sizes) == POOL_SIZES, (
        "kernel hard-codes the separable/hierarchical (5, 9, 13) decomposition")
    # TODO(synk): generic pool_sizes would need a non-hierarchical fallback.
    N, C, H, W = x.shape

    # NCHW -> NHWC so channels sit on the 128-lane axis inside the kernel.
    # (These two transposes are the PyTorch-layout tax; NHWC callers should
    # use spp_nhwc() directly and skip them.)
    x_nhwc = jnp.transpose(x, (0, 2, 3, 1))                 # (N, H, W, C)
    pooled = spp_nhwc(x_nhwc)                               # (N, 4, H, W, C)

    # (N, 4, H, W, C) -> (N, 4, C, H, W) -> free reshape to (N, 4C, H, W):
    # exactly the PyTorch channel-concat order [pool13, pool9, pool5, x].
    return jnp.transpose(pooled, (0, 1, 4, 2, 3)).reshape(N, 4 * C, H, W)


def spp_reference(x, pool_sizes=POOL_SIZES):
    """Pure-JAX reference matching PyTorch MaxPool2d(k, 1, k//2) + concat."""
    feats = []
    for k in pool_sizes[::-1]:
        p = k // 2
        y = lax.reduce_window(
            x, -jnp.inf, lax.max,
            window_dimensions=(1, 1, k, k),
            window_strides=(1, 1, 1, 1),
            padding=((0, 0), (0, 0), (p, p), (p, p)))
        feats.append(y.astype(x.dtype))
    feats.append(x)
    return jnp.concatenate(feats, axis=1)


if __name__ == "__main__":
    key = jax.random.PRNGKey(0)

    # Small smoke-test shape (as specified).
    N, C, H, W = 2, 4, 16, 16
    x = jax.random.normal(key, (N, C, H, W), dtype=jnp.float32)
    out = jax.block_until_ready(spp(x))
    ref = spp_reference(x)
    assert out.shape == (N, 4 * C, H, W), out.shape
    assert jnp.allclose(out, ref, atol=1e-6, rtol=1e-6), "mismatch vs reference"

    # Lane-dense / gridded path (C multiple of 128, YOLO-like spatial size).
    x2 = jax.random.normal(jax.random.PRNGKey(1), (1, 256, 13, 13),
                           dtype=jnp.float32)
    out2 = jax.block_until_ready(spp(x2))
    ref2 = spp_reference(x2)
    assert out2.shape == (1, 4 * 256, 13, 13), out2.shape
    assert jnp.allclose(out2, ref2, atol=1e-6, rtol=1e-6), "mismatch (lane-dense)"

    print("KERNEL_OK")
</pallas_src>

<mosaic_0001>
module attributes {stable_mosaic.version = 11 : i64} {
  func.func @_spp_kernel(%arg0: i32, %arg1: i32, %arg2: memref<1x16x16x128xf32, #tpu.memory_space<vmem>>, %arg3: memref<1x4x16x16x128xf32, #tpu.memory_space<vmem>>, %arg4: memref<16x28x128xf32, #tpu.memory_space<vmem>>, %arg5: memref<28x24x128xf32, #tpu.memory_space<vmem>>, %arg6: memref<24x24x128xf32, #tpu.memory_space<vmem>>) attributes {dimension_semantics = [#tpu.dimension_semantics<parallel>, #tpu.dimension_semantics<arbitrary>], iteration_bounds = array<i64: 1, 2>, scalar_prefetch = 0 : i64, scratch_operands = 3 : i64, tpu.core_type = #tpu.core_type<tc>, window_params = [{transform_indices = @transform_0, window_bounds = array<i64: 1, 16, 16, 128>}, {transform_indices = @transform_1, window_bounds = array<i64: 1, 4, 16, 16, 128>}]} {
    %c0_i32 = arith.constant 0 : i32
    %0 = arith.cmpi eq, %arg1, %c0_i32 : i32
    %1 = arith.extui %0 : i1 to i32
    %cst = arith.constant 0xFF800000 : f32
    %c0_i32_0 = arith.constant 0 : i32
    %2 = arith.cmpi ne, %1, %c0_i32_0 : i32
    scf.if %2 {
      %61 = vector.broadcast %cst : f32 to vector<16x6x128xf32>
      %c0_87 = arith.constant 0 : index
      %c0_88 = arith.constant 0 : index
      %c0_89 = arith.constant 0 : index
      %62 = vector.load %arg4[%c0_87, %c0_88, %c0_89] : memref<16x28x128xf32, #tpu.memory_space<vmem>>, vector<16x6x128xf32>
      tpu.vector_store %arg4[%c0_87, %c0_88, %c0_89], %61 {strides = array<i32>} : memref<16x28x128xf32, #tpu.memory_space<vmem>>, vector<16x6x128xf32>,
      %63 = vector.broadcast %cst : f32 to vector<16x6x128xf32>
      %c0_90 = arith.constant 0 : index
      %c22 = arith.constant 22 : index
      %c0_91 = arith.constant 0 : index
      %64 = vector.load %arg4[%c0_90, %c22, %c0_91] : memref<16x28x128xf32, #tpu.memory_space<vmem>>, vector<16x6x128xf32>
      tpu.vector_store %arg4[%c0_90, %c22, %c0_91], %63 {strides = array<i32>} : memref<16x28x128xf32, #tpu.memory_space<vmem>>, vector<16x6x128xf32>,
      %65 = vector.broadcast %cst : f32 to vector<6x24x128xf32>
      %c0_92 = arith.constant 0 : index
      %c0_93 = arith.constant 0 : index
      %c0_94 = arith.constant 0 : index
      %66 = vector.load %arg5[%c0_92, %c0_93, %c0_94] : memref<28x24x128xf32, #tpu.memory_space<vmem>>, vector<6x24x128xf32>
      tpu.vector_store %arg5[%c0_92, %c0_93, %c0_94], %65 {strides = array<i32>} : memref<28x24x128xf32, #tpu.memory_space<vmem>>, vector<6x24x128xf32>,
      %67 = vector.broadcast %cst : f32 to vector<6x24x128xf32>
      %c22_95 = arith.constant 22 : index
      %c0_96 = arith.constant 0 : index
      %c0_97 = arith.constant 0 : index
      %68 = vector.load %arg5[%c22_95, %c0_96, %c0_97] : memref<28x24x128xf32, #tpu.memory_space<vmem>>, vector<6x24x128xf32>
      tpu.vector_store %arg5[%c22_95, %c0_96, %c0_97], %67 {strides = array<i32>} : memref<28x24x128xf32, #tpu.memory_space<vmem>>, vector<6x24x128xf32>,
    } else {
    }
    %c0 = arith.constant 0 : index
    %c0_1 = arith.constant 0 : index
    %c0_2 = arith.constant 0 : index
    %c0_3 = arith.constant 0 : index
    %3 = vector.load %arg2[%c0, %c0_1, %c0_2, %c0_3] : memref<1x16x16x128xf32, #tpu.memory_space<vmem>>, vector<1x16x16x128xf32>
    %4 = vector.shape_cast %3 : vector<1x16x16x128xf32> to vector<16x16x128xf32>
    %c0_4 = arith.constant 0 : index
    %c6 = arith.constant 6 : index
    %c0_5 = arith.constant 0 : index
    %5 = vector.load %arg4[%c0_4, %c6, %c0_5] : memref<16x28x128xf32, #tpu.memory_space<vmem>>, vector<16x16x128xf32>
    tpu.vector_store %arg4[%c0_4, %c6, %c0_5], %4 {strides = array<i32>} : memref<16x28x128xf32, #tpu.memory_space<vmem>>, vector<16x16x128xf32>,
    %c0_6 = arith.constant 0 : index
    %c0_7 = arith.constant 0 : index
    %c0_8 = arith.constant 0 : index
    %6 = vector.load %arg4[%c0_6, %c0_7, %c0_8] : memref<16x28x128xf32, #tpu.memory_space<vmem>>, vector<16x26x128xf32>
    %c0_9 = arith.constant 0 : index
    %c1 = arith.constant 1 : index
    %c0_10 = arith.constant 0 : index
    %7 = vector.load %arg4[%c0_9, %c1, %c0_10] : memref<16x28x128xf32, #tpu.memory_space<vmem>>, vector<16x26x128xf32>
    %8 = arith.maximumf %6, %7 : vector<16x26x128xf32>
    %9 = vector.extract_strided_slice %8 {offsets = [0, 0, 0], sizes = [16, 24, 128], strides = [1, 1, 1]} : vector<16x26x128xf32> to vector<16x24x128xf32>
    %10 = vector.extract_strided_slice %8 {offsets = [0, 2, 0], sizes = [16, 24, 128], strides = [1, 1, 1]} : vector<16x26x128xf32> to vector<16x24x128xf32>
    %11 = arith.maximumf %9, %10 : vector<16x24x128xf32>
    %c0_11 = arith.constant 0 : index
    %c4 = arith.constant 4 : index
    %c0_12 = arith.constant 0 : index
    %12 = vector.load %arg4[%c0_11, %c4, %c0_12] : memref<16x28x128xf32, #tpu.memory_space<vmem>>, vector<16x24x128xf32>
    %13 = arith.maximumf %11, %12 : vector<16x24x128xf32>
    %c6_13 = arith.constant 6 : index
    %c0_14 = arith.constant 0 : index
    %c0_15 = arith.constant 0 : index
    %14 = vector.load %arg5[%c6_13, %c0_14, %c0_15] : memref<28x24x128xf32, #tpu.memory_space<vmem>>, vector<16x24x128xf32>
    tpu.vector_store %arg5[%c6_13, %c0_14, %c0_15], %13 {strides = array<i32>} : memref<28x24x128xf32, #tpu.memory_space<vmem>>, vector<16x24x128xf32>,
    %c0_16 = arith.constant 0 : index
    %c0_17 = arith.constant 0 : index
    %c0_18 = arith.constant 0 : index
    %15 = vector.load %arg5[%c0_16, %c0_17, %c0_18] : memref<28x24x128xf32, #tpu.memory_space<vmem>>, vector<26x24x128xf32>
    %c1_19 = arith.constant 1 : index
    %c0_20 = arith.constant 0 : index
    %c0_21 = arith.constant 0 : index
    %16 = vector.load %arg5[%c1_19, %c0_20, %c0_21] : memref<28x24x128xf32, #tpu.memory_space<vmem>>, vector<26x24x128xf32>
    %17 = arith.maximumf %15, %16 : vector<26x24x128xf32>
    %18 = vector.extract_strided_slice %17 {offsets = [0, 0, 0], sizes = [24, 24, 128], strides = [1, 1, 1]} : vector<26x24x128xf32> to vector<24x24x128xf32>
    %19 = vector.extract_strided_slice %17 {offsets = [2, 0, 0], sizes = [24, 24, 128], strides = [1, 1, 1]} : vector<26x24x128xf32> to vector<24x24x128xf32>
    %20 = arith.maximumf %18, %19 : vector<24x24x128xf32>
    %c4_22 = arith.constant 4 : index
    %c0_23 = arith.constant 0 : index
    %c0_24 = arith.constant 0 : index
    %21 = vector.load %arg5[%c4_22, %c0_23, %c0_24] : memref<28x24x128xf32, #tpu.memory_space<vmem>>, vector<24x24x128xf32>
    %22 = arith.maximumf %20, %21 : vector<24x24x128xf32>
    %c0_25 = arith.constant 0 : index
    %c0_26 = arith.constant 0 : index
    %c0_27 = arith.constant 0 : index
    %23 = vector.load %arg6[%c0_25, %c0_26, %c0_27] : memref<24x24x128xf32, #tpu.memory_space<vmem>>, vector<24x24x128xf32>
    tpu.vector_store %arg6[%c0_25, %c0_26, %c0_27], %22 {strides = array<i32>} : memref<24x24x128xf32, #tpu.memory_space<vmem>>, vector<24x24x128xf32>,
    %c4_28 = arith.constant 4 : index
    %c4_29 = arith.constant 4 : index
    %c0_30 = arith.constant 0 : index
    %24 = vector.load %arg6[%c4_28, %c4_29, %c0_30] : memref<24x24x128xf32, #tpu.memory_space<vmem>>, vector<16x16x128xf32>
    %c0_31 = arith.constant 0 : index
    %c2 = arith.constant 2 : index
    %c0_32 = arith.constant 0 : index
    %c0_33 = arith.constant 0 : index
    %c0_34 = arith.constant 0 : index
    %25 = vector.load %arg3[%c0_31, %c2, %c0_32, %c0_33, %c0_34] : memref<1x4x16x16x128xf32, #tpu.memory_space<vmem>>, vector<1x1x16x16x128xf32>
    %26 = vector.shape_cast %25 : vector<1x1x16x16x128xf32> to vector<16x16x128xf32>
    %27 = vector.shape_cast %24 : vector<16x16x128xf32> to vector<1x1x16x16x128xf32>
    tpu.vector_store %arg3[%c0_31, %c2, %c0_32, %c0_33, %c0_34], %27 {strides = array<i32>} : memref<1x4x16x16x128xf32, #tpu.memory_space<vmem>>, vector<1x1x16x16x128xf32>,
    %c2_35 = arith.constant 2 : index
    %c2_36 = arith.constant 2 : index
    %c0_37 = arith.constant 0 : index
    %28 = vector.load %arg6[%c2_35, %c2_36, %c0_37] : memref<24x24x128xf32, #tpu.memory_space<vmem>>, vector<16x16x128xf32>
    %c2_38 = arith.constant 2 : index
    %c6_39 = arith.constant 6 : index
    %c0_40 = arith.constant 0 : index
    %29 = vector.load %arg6[%c2_38, %c6_39, %c0_40] : memref<24x24x128xf32, #tpu.memory_space<vmem>>, vector<16x16x128xf32>
    %30 = arith.maximumf %28, %29 : vector<16x16x128xf32>
    %c6_41 = arith.constant 6 : index
    %c2_42 = arith.constant 2 : index
    %c0_43 = arith.constant 0 : index
    %31 = vector.load %arg6[%c6_41, %c2_42, %c0_43] : memref<24x24x128xf32, #tpu.memory_space<vmem>>, vector<16x16x128xf32>
    %32 = arith.maximumf %30, %31 : vector<16x16x128xf32>
    %c6_44 = arith.constant 6 : index
    %c6_45 = arith.constant 6 : index
    %c0_46 = arith.constant 0 : index
    %33 = vector.load %arg6[%c6_44, %c6_45, %c0_46] : memref<24x24x128xf32, #tpu.memory_space<vmem>>, vector<16x16x128xf32>
    %34 = arith.maximumf %32, %33 : vector<16x16x128xf32>
    %c0_47 = arith.constant 0 : index
    %c1_48 = arith.constant 1 : index
    %c0_49 = arith.constant 0 : index
    %c0_50 = arith.constant 0 : index
    %c0_51 = arith.constant 0 : index
    %35 = vector.load %arg3[%c0_47, %c1_48, %c0_49, %c0_50, %c0_51] : memref<1x4x16x16x128xf32, #tpu.memory_space<vmem>>, vector<1x1x16x16x128xf32>
    %36 = vector.shape_cast %35 : vector<1x1x16x16x128xf32> to vector<16x16x128xf32>
    %37 = vector.shape_cast %34 : vector<16x16x128xf32> to vector<1x1x16x16x128xf32>
    tpu.vector_store %arg3[%c0_47, %c1_48, %c0_49, %c0_50, %c0_51], %37 {strides = array<i32>} : memref<1x4x16x16x128xf32, #tpu.memory_space<vmem>>, vector<1x1x16x16x128xf32>,
    %c0_52 = arith.constant 0 : index
    %c0_53 = arith.constant 0 : index
    %c0_54 = arith.constant 0 : index
    %38 = vector.load %arg6[%c0_52, %c0_53, %c0_54] : memref<24x24x128xf32, #tpu.memory_space<vmem>>, vector<16x16x128xf32>
    %c0_55 = arith.constant 0 : index
    %c4_56 = arith.constant 4 : index
    %c0_57 = arith.constant 0 : index
    %39 = vector.load %arg6[%c0_55, %c4_56, %c0_57] : memref<24x24x128xf32, #tpu.memory_space<vmem>>, vector<16x16x128xf32>
    %40 = arith.maximumf %38, %39 : vector<16x16x128xf32>
    %c0_58 = arith.constant 0 : index
    %c8 = arith.constant 8 : index
    %c0_59 = arith.constant 0 : index
    %41 = vector.load %arg6[%c0_58, %c8, %c0_59] : memref<24x24x128xf32, #tpu.memory_space<vmem>>, vector<16x16x128xf32>
    %42 = arith.maximumf %40, %41 : vector<16x16x128xf32>
    %c4_60 = arith.constant 4 : index
    %c0_61 = arith.constant 0 : index
    %c0_62 = arith.constant 0 : index
    %43 = vector.load %arg6[%c4_60, %c0_61, %c0_62] : memref<24x24x128xf32, #tpu.memory_space<vmem>>, vector<16x16x128xf32>
    %44 = arith.maximumf %42, %43 : vector<16x16x128xf32>
    %c4_63 = arith.constant 4 : index
    %c4_64 = arith.constant 4 : index
    %c0_65 = arith.constant 0 : index
    %45 = vector.load %arg6[%c4_63, %c4_64, %c0_65] : memref<24x24x128xf32, #tpu.memory_space<vmem>>, vector<16x16x128xf32>
    %46 = arith.maximumf %44, %45 : vector<16x16x128xf32>
    %c4_66 = arith.constant 4 : index
    %c8_67 = arith.constant 8 : index
    %c0_68 = arith.constant 0 : index
    %47 = vector.load %arg6[%c4_66, %c8_67, %c0_68] : memref<24x24x128xf32, #tpu.memory_space<vmem>>, vector<16x16x128xf32>
    %48 = arith.maximumf %46, %47 : vector<16x16x128xf32>
    %c8_69 = arith.constant 8 : index
    %c0_70 = arith.constant 0 : index
    %c0_71 = arith.constant 0 : index
    %49 = vector.load %arg6[%c8_69, %c0_70, %c0_71] : memref<24x24x128xf32, #tpu.memory_space<vmem>>, vector<16x16x128xf32>
    %50 = arith.maximumf %48, %49 : vector<16x16x128xf32>
    %c8_72 = arith.constant 8 : index
    %c4_73 = arith.constant 4 : index
    %c0_74 = arith.constant 0 : index
    %51 = vector.load %arg6[%c8_72, %c4_73, %c0_74] : memref<24x24x128xf32, #tpu.memory_space<vmem>>, vector<16x16x128xf32>
    %52 = arith.maximumf %50, %51 : vector<16x16x128xf32>
    %c8_75 = arith.constant 8 : index
    %c8_76 = arith.constant 8 : index
    %c0_77 = arith.constant 0 : index
    %53 = vector.load %arg6[%c8_75, %c8_76, %c0_77] : memref<24x24x128xf32, #tpu.memory_space<vmem>>, vector<16x16x128xf32>
    %54 = arith.maximumf %52, %53 : vector<16x16x128xf32>
    %c0_78 = arith.constant 0 : index
    %c0_79 = arith.constant 0 : index
    %c0_80 = arith.constant 0 : index
    %c0_81 = arith.constant 0 : index
    %c0_82 = arith.constant 0 : index
    %55 = vector.load %arg3[%c0_78, %c0_79, %c0_80, %c0_81, %c0_82] : memref<1x4x16x16x128xf32, #tpu.memory_space<vmem>>, vector<1x1x16x16x128xf32>
    %56 = vector.shape_cast %55 : vector<1x1x16x16x128xf32> to vector<16x16x128xf32>
    %57 = vector.shape_cast %54 : vector<16x16x128xf32> to vector<1x1x16x16x128xf32>
    tpu.vector_store %arg3[%c0_78, %c0_79, %c0_80, %c0_81, %c0_82], %57 {strides = array<i32>} : memref<1x4x16x16x128xf32, #tpu.memory_space<vmem>>, vector<1x1x16x16x128xf32>,
    %c0_83 = arith.constant 0 : index
    %c3 = arith.constant 3 : index
    %c0_84 = arith.constant 0 : index
    %c0_85 = arith.constant 0 : index
    %c0_86 = arith.constant 0 : index
    %58 = vector.load %arg3[%c0_83, %c3, %c0_84, %c0_85, %c0_86] : memref<1x4x16x16x128xf32, #tpu.memory_space<vmem>>, vector<1x1x16x16x128xf32>
    %59 = vector.shape_cast %58 : vector<1x1x16x16x128xf32> to vector<16x16x128xf32>
    %60 = vector.shape_cast %4 : vector<16x16x128xf32> to vector<1x1x16x16x128xf32>
    tpu.vector_store %arg3[%c0_83, %c3, %c0_84, %c0_85, %c0_86], %60 {strides = array<i32>} : memref<1x4x16x16x128xf32, #tpu.memory_space<vmem>>, vector<1x1x16x16x128xf32>,
    return
  }
  func.func @transform_0(%arg0: i32, %arg1: i32) -> (i32, i32, i32, i32) {
    %c0_i32 = arith.constant 0 : i32
    %c0_i32_0 = arith.constant 0 : i32
    %c0_i32_1 = arith.constant 0 : i32
    return %arg1, %c0_i32, %c0_i32_0, %arg0 : i32, i32, i32, i32
  }
  func.func @transform_1(%arg0: i32, %arg1: i32) -> (i32, i32, i32, i32, i32) {
    %c0_i32 = arith.constant 0 : i32
    %c0_i32_0 = arith.constant 0 : i32
    %c0_i32_1 = arith.constant 0 : i32
    %c0_i32_2 = arith.constant 0 : i32
    return %arg1, %c0_i32, %c0_i32_0, %c0_i32_1, %arg0 : i32, i32, i32, i32, i32
  }
}

</mosaic_0001>

<llo_original>
// kernel: tpu_custom_call.1
$region0: #{tpu_custom_call.1}
  #allocation0 [shape = 'u32[]', space=smem, size = 0x4, offset = 0x4, fixed_abs, tag = 'smem constant byte address 0x4 - core index']
  #allocation1 [shape = 'u32[72,128]{1,0:T(1,128)}', space=vmem, size = 0x9000, scoped, tag = 'internal scratch']
  #allocation2 [shape = 'f32[16,28,128]{2,1,0:T(8,128)}', space=vmem, size = 0x40000, scoped, tag = 'scratch operand']
  #allocation3 [shape = 'f32[28,24,128]{2,1,0:T(8,128)}', space=vmem, size = 0x54000, scoped, tag = 'scratch operand']
  #allocation4 [shape = 'f32[24,24,128]{2,1,0:T(8,128)}', space=vmem, size = 0x48000, scoped, tag = 'scratch operand']
  %s0 = inlined_call_operand.hbm [shape: f32[2,16,16,128], index: 0, kind: input, shape index: {}]
  %s1 = inlined_call_operand.hbm [shape: f32[2,4,16,16,128], index: 1, kind: output, shape index: {}]
  %s2 = sld [smem:[#allocation0]]
  $region45: #{tpu_custom_call.1} parent=0
    _
  %s4 = ssub.s32 1, %s2
  %s5 = scalar_select 0, %s4, %s2
  $region1: #{tpu_custom_call.1} parent=0
    #allocation5 [shape = 'u8[262144]{0}', space=vmem, size = 0x40000, scoped, tag = 'input window, operand 0']
    #allocation6 [shape = 's32[2]{0}', space=sflag, size = 0x8, scoped, tag = 'scoped memory for tpu_custom_call.1']
    #allocation7 [shape = 's32[2]{0}', space=sflag, size = 0x8, scoped, tag = 'scoped memory for tpu_custom_call.1']
    #allocation8 [shape = 'u8[1048576]{0}', space=vmem, size = 0x100000, scoped, tag = 'output window, operand 0']
    %6 = vsyncpa [#allocation6], 0
    %s7 = scalar_lea.sflag [#allocation6], 1
    %8 = vsyncpa %s7, 0
    %9 = vsyncpa [#allocation7], 0
    %s10 = scalar_lea.sflag [#allocation7], 1
    %11 = vsyncpa %s10, 0
    loop: start=0, step=1, limit=4
    $region2: #{tpu_custom_call.1} parent=1 // loop_pre_header
      _
    $region3: #{tpu_custom_call.1} parent=1 // loop_header
      %s13 = sphi 0, %s17
      %p14 = scmp.ge.s32.totalorder %s13, 4
      %s20 = sphi 0, %s32
      %s21 = sphi 0, %s28
      %s22 = sphi 0, %s20
      %s23 = sphi 0, %s21
      %s24 = sphi 0, %s22
      %s25 = sphi 0, %s23
      %s37 = sphi 0, %s39
      %s40 = sphi 0, %s37
      %s41 = sphi 0, %s40
      %s57 = sphi 0, %s41
      %s65 = sphi 0, %s67
      %s68 = sphi 0, %s65
      %s69 = sphi 0, %s68
      %s85 = sphi 0, %s69
    $region4: #{tpu_custom_call.1} parent=1 // loop_header_branch
      %16 = sbr.rel (%p14) target = $region8
    $region5: #{tpu_custom_call.1} parent=1 // loop_body
      %s18 = ssub.s32 %s13, 1
      %s19 = ssub.s32 %s13, 2
      %s26 = sadd.s32 1, %s21
      %p27 = scmp.ge.s32.totalorder %s26, 2
      %s28 = scalar_select %p27, 0, %s26
      %s29 = sadd.s32 1, %s20
      %s30 = scalar_select %p27, %s29, %s20
      %p31 = scmp.ge.s32.totalorder %s30, 1
      %s32 = scalar_select %p31, 0, %s30
      %s33 = ssub.s32 %s21, %s28
      %s34 = ssub.s32 %s20, %s32
      %s35 = sor.u32 %s33, %s34
      %p36 = scmp.eq.s32.totalorder %s35, 0
      %s38 = sadd.s32 %s37, 1
      %s39 = scalar_select %p36, %s37, %s38
      %p42 = pneg %p36
      %p43 = scmp.eq.s32.totalorder %s13, 1
      %p44 = por %p42, %p43
      %p45 = scmp.ne.s32.totalorder %s37, %s40
      %p46 = scmp.eq.s32.totalorder %s13, 0
      %p47 = por %p45, %p46
      %p48 = scmp.ne.s32.totalorder %s37, %s40
      %p49 = scmp.eq.s32.totalorder %s18, 1
      %p50 = por %p48, %p49
      %p51 = scmp.ne.s32.totalorder %s40, %s41
      %p52 = scmp.eq.s32.totalorder %s18, 0
      %p53 = por %p51, %p52
      %p54 = scmp.ne.s32.totalorder %s40, %s41
      %p55 = scmp.eq.s32.totalorder %s19, 1
      %p56 = por %p54, %p55
      %p58 = scmp.ne.s32.totalorder %s41, %s57
      %p59 = scmp.eq.s32.totalorder %s19, 0
      %p60 = por %p58, %p59
      %s61 = ssub.s32 %s21, %s28
      %s62 = ssub.s32 %s20, %s32
      %s63 = sor.u32 %s61, %s62
      %p64 = scmp.eq.s32.totalorder %s63, 0
      %s66 = sadd.s32 %s65, 1
      %s67 = scalar_select %p64, %s65, %s66
      %p70 = pneg %p64
      %p71 = scmp.eq.s32.totalorder %s13, 1
      %p72 = por %p70, %p71
      %p73 = scmp.ne.s32.totalorder %s65, %s68
      %p74 = scmp.eq.s32.totalorder %s13, 0
      %p75 = por %p73, %p74
      %p76 = scmp.ne.s32.totalorder %s65, %s68
      %p77 = scmp.eq.s32.totalorder %s18, 1
      %p78 = por %p76, %p77
      %p79 = scmp.ne.s32.totalorder %s68, %s69
      %p80 = scmp.eq.s32.totalorder %s18, 0
      %p81 = por %p79, %p80
      %p82 = scmp.ne.s32.totalorder %s68, %s69
      %p83 = scmp.eq.s32.totalorder %s19, 1
      %p84 = por %p82, %p83
      %p86 = scmp.ne.s32.totalorder %s69, %s85
      %p87 = scmp.eq.s32.totalorder %s19, 0
      %p88 = por %p86, %p87
      %p89 = scmp.le.s32.totalorder 1, %s13
      %p90 = scmp.lt.s32.totalorder %s13, 3
      %p91 = pnand %p89, %p90
      %p92 = pneg %p91
      // Predicated region
      $region9: #{tpu_custom_call.1} parent=5 // pred_check
        _
      $region10: #{tpu_custom_call.1} parent=5 // pred_check_branch
        %94 = sbr.rel (%p91) target = $region12
      $region11: #{tpu_custom_call.1} parent=5 // pred_region
        %s95 = ssub.s32 %s13, 1
      $region12: #{tpu_custom_call.1} parent=5 // pred_fallthru
        _
      %p96 = scmp.lt.s32.totalorder %s13, 2
      // Predicated region
      $region13: #{tpu_custom_call.1} parent=5 // pred_check
        %p97 = pneg %p96
      $region14: #{tpu_custom_call.1} parent=5 // pred_check_branch
        %99 = sbr.rel (%p97) target = $region16
      $region15: #{tpu_custom_call.1} parent=5 // pred_region
        // Predicated region
        $region17: #{tpu_custom_call.1} parent=15 // pred_check
          %p100 = pneg %p47
        $region18: #{tpu_custom_call.1} parent=15 // pred_check_branch
          %102 = sbr.rel (%p100) target = $region20
        $region19: #{tpu_custom_call.1} parent=15 // pred_region
          %s103 = sand.u32 %s37, 1
          %s104 = scalar_lea.sflag [#allocation6], %s103
          %s105 = sand.u32 %s37, 1
          %s106 = smul.addr %s105, 256
          %s107 = scalar_lea.vmem [#allocation5], %s106
          %109 = vsyncadd %s104, 0
          %s110 = smul.addr %s21, 32
          %s111 = sadd.s32 %s20, %s110
          %s112 = smul.addr %s111, 8
          %s113 = scalar_lea.hbm %s0, %s112
          %s114 = sshll.u32 %s113, 4
          %s115 = int_to_ptr.hbm [resolvable:$true] %s114
          %s116 = sshll.u32 %s107, 4
          %s117 = int_to_ptr.vmem [resolvable:$true] %s116
          %122 = dma.hbm_to_vmem [thread:$0]  %s115, 4096, %s117, %s104, 128, 128, 8
        $region20: #{tpu_custom_call.1} parent=15 // pred_fallthru
          _
      $region16: #{tpu_custom_call.1} parent=5 // pred_fallthru
        _
      %p123 = scmp.le.s32.totalorder 1, %s13
      %p124 = scmp.lt.s32.totalorder %s13, 3
      %p125 = pnand %p123, %p124
      %p126 = pneg %p125
      // Predicated region
      $region21: #{tpu_custom_call.1} parent=5 // pred_check
        _
      $region22: #{tpu_custom_call.1} parent=5 // pred_check_branch
        %128 = sbr.rel (%p125) target = $region24
      $region23: #{tpu_custom_call.1} parent=5 // pred_region
        %s129 = ssub.s32 %s13, 1
        %s130 = sand.u32 %s40, 1
        %s131 = scalar_lea.sflag [#allocation6], %s130
        %s132 = sand.u32 %s40, 1
        %s133 = smul.addr %s132, 256
        %s134 = scalar_lea.vmem [#allocation5], %s133
        // Predicated region
        $region25: #{tpu_custom_call.1} parent=23 // pred_check
          %p135 = pneg %p53
        $region26: #{tpu_custom_call.1} parent=23 // pred_check_branch
          %137 = sbr.rel (%p135) target = $region28
        $region27: #{tpu_custom_call.1} parent=23 // pred_region
          %139 = dma.done %s131, 4096
        $region28: #{tpu_custom_call.1} parent=23 // pred_fallthru
          _
        %s140 = sand.u32 %s40, 1
        %s141 = scalar_lea.sflag [#allocation6], %s140
        %s142 = sand.u32 %s40, 1
        %s143 = smul.addr %s142, 256
        %s144 = scalar_lea.vmem [#allocation5], %s143
        %p145 = pneg %p53
        %p146 = pneg %p50
        %p147 = pneg %p81
        %p148 = pneg %p78
        %s149 = sand.u32 %s68, 1
        %s150 = scalar_lea.sflag [#allocation7], %s149
        %s151 = sand.u32 %s68, 1
        %s152 = smul.addr %s151, 1024
        %s153 = scalar_lea.vmem [#allocation8], %s152
        %p154 = scmp.eq.s32.totalorder %s23, 0
        // Predicated region
        $region29: #{tpu_custom_call.1} parent=23 // pred_check
          %p155 = pneg %p154
        $region30: #{tpu_custom_call.1} parent=23 // pred_check_branch
          %157 = sbr.rel (%p155) target = $region32
        $region31: #{tpu_custom_call.1} parent=23 // pred_region
          %158 = vst [vmem:[#allocation2] sm:$0x3f] -inf
          %159 = vst [vmem:[#allocation2 + $0x20] sm:$0x3f] -inf
          %160 = vst [vmem:[#allocation2 + $0x40] sm:$0x3f] -inf
          %161 = vst [vmem:[#allocation2 + $0x60] sm:$0x3f] -inf
          %162 = vst [vmem:[#allocation2 + $0x80] sm:$0x3f] -inf
          %163 = vst [vmem:[#allocation2 + $0xa0] sm:$0x3f] -inf
          %164 = vst [vmem:[#allocation2 + $0xc0] sm:$0x3f] -inf
          %165 = vst [vmem:[#allocation2 + $0xe0] sm:$0x3f] -inf
          %166 = vst [vmem:[#allocation2 + $0x100] sm:$0x3f] -inf
          %167 = vst [vmem:[#allocation2 + $0x120] sm:$0x3f] -inf
          %168 = vst [vmem:[#allocation2 + $0x140] sm:$0x3f] -inf
          %169 = vst [vmem:[#allocation2 + $0x160] sm:$0x3f] -inf
          %170 = vst [vmem:[#allocation2 + $0x180] sm:$0x3f] -inf
          %171 = vst [vmem:[#allocation2 + $0x1a0] sm:$0x3f] -inf
          %172 = vst [vmem:[#allocation2 + $0x1c0] sm:$0x3f] -inf
          %173 = vst [vmem:[#allocation2 + $0x1e0] sm:$0x3f] -inf
          %174 = vst [vmem:[#allocation2 + $0x16] sm:$0x3f] -inf
          %175 = vst [vmem:[#allocation2 + $0x36] sm:$0x3f] -inf
          %176 = vst [vmem:[#allocation2 + $0x56] sm:$0x3f] -inf
          %177 = vst [vmem:[#allocation2 + $0x76] sm:$0x3f] -inf
          %178 = vst [vmem:[#allocation2 + $0x96] sm:$0x3f] -inf
          %179 = vst [vmem:[#allocation2 + $0xb6] sm:$0x3f] -inf
          %180 = vst [vmem:[#allocation2 + $0xd6] sm:$0x3f] -inf
          %181 = vst [vmem:[#allocation2 + $0xf6] sm:$0x3f] -inf
          %182 = vst [vmem:[#allocation2 + $0x116] sm:$0x3f] -inf
          %183 = vst [vmem:[#allocation2 + $0x136] sm:$0x3f] -inf
          %184 = vst [vmem:[#allocation2 + $0x156] sm:$0x3f] -inf
          %185 = vst [vmem:[#allocation2 + $0x176] sm:$0x3f] -inf
          %186 = vst [vmem:[#allocation2 + $0x196] sm:$0x3f] -inf
          %187 = vst [vmem:[#allocation2 + $0x1b6] sm:$0x3f] -inf
          %188 = vst [vmem:[#allocation2 + $0x1d6] sm:$0x3f] -inf
          %189 = vst [vmem:[#allocation2 + $0x1f6] sm:$0x3f] -inf
          %190 = vst [vmem:[#allocation3] sm:$0xff] -inf
          %191 = vst [vmem:[#allocation3 + $0x8] sm:$0xff] -inf
          %192 = vst [vmem:[#allocation3 + $0x10] sm:$0xff] -inf
          %193 = vst [vmem:[#allocation3 + $0x18] sm:$0xff] -inf
          %194 = vst [vmem:[#allocation3 + $0x20] sm:$0xff] -inf
          %195 = vst [vmem:[#allocation3 + $0x28] sm:$0xff] -inf
          %196 = vst [vmem:[#allocation3 + $0x30] sm:$0xff] -inf
          %197 = vst [vmem:[#allocation3 + $0x38] sm:$0xff] -inf
          %198 = vst [vmem:[#allocation3 + $0x40] sm:$0xff] -inf
          %199 = vst [vmem:[#allocation3 + $0x48] sm:$0xff] -inf
          %200 = vst [vmem:[#allocation3 + $0x50] sm:$0xff] -inf
          %201 = vst [vmem:[#allocation3 + $0x58] sm:$0xff] -inf
          %202 = vst [vmem:[#allocation3 + $0x60] sm:$0xff] -inf
          %203 = vst [vmem:[#allocation3 + $0x68] sm:$0xff] -inf
          %204 = vst [vmem:[#allocation3 + $0x70] sm:$0xff] -inf
          %205 = vst [vmem:[#allocation3 + $0x78] sm:$0xff] -inf
          %206 = vst [vmem:[#allocation3 + $0x80] sm:$0xff] -inf
          %207 = vst [vmem:[#allocation3 + $0x88] sm:$0xff] -inf
          %s208 = scalar_lea.vmem [#allocation3], 528
          %209 = vst [vmem:[%s208] sm:$0xff] -inf
          %210 = vst [vmem:[%s208 + $0x8] sm:$0xff] -inf
          %211 = vst [vmem:[%s208 + $0x10] sm:$0xff] -inf
          %212 = vst [vmem:[%s208 + $0x18] sm:$0xff] -inf
          %213 = vst [vmem:[%s208 + $0x20] sm:$0xff] -inf
          %214 = vst [vmem:[%s208 + $0x28] sm:$0xff] -inf
          %215 = vst [vmem:[%s208 + $0x30] sm:$0xff] -inf
          %216 = vst [vmem:[%s208 + $0x38] sm:$0xff] -inf
          %217 = vst [vmem:[%s208 + $0x40] sm:$0xff] -inf
          %218 = vst [vmem:[%s208 + $0x48] sm:$0xff] -inf
          %219 = vst [vmem:[%s208 + $0x50] sm:$0xff] -inf
          %220 = vst [vmem:[%s208 + $0x58] sm:$0xff] -inf
          %221 = vst [vmem:[%s208 + $0x60] sm:$0xff] -inf
          %222 = vst [vmem:[%s208 + $0x68] sm:$0xff] -inf
          %223 = vst [vmem:[%s208 + $0x70] sm:$0xff] -inf
          %224 = vst [vmem:[%s208 + $0x78] sm:$0xff] -inf
          %225 = vst [vmem:[%s208 + $0x80] sm:$0xff] -inf
          %226 = vst [vmem:[%s208 + $0x88] sm:$0xff] -inf
        $region32: #{tpu_custom_call.1} parent=23 // pred_fallthru
          _
        %v227 = vld [vmem:[%s134] sm:$0xff]
        %v228 = vld [vmem:[%s134 + $0x8] sm:$0xff]
        %v229 = vld [vmem:[%s134 + $0x10] sm:$0xff]
        %v230 = vld [vmem:[%s134 + $0x18] sm:$0xff]
        %v231 = vld [vmem:[%s134 + $0x20] sm:$0xff]
        %v232 = vld [vmem:[%s134 + $0x28] sm:$0xff]
        %v233 = vld [vmem:[%s134 + $0x30] sm:$0xff]
        %v234 = vld [vmem:[%s134 + $0x38] sm:$0xff]
        %v235 = vld [vmem:[%s134 + $0x40] sm:$0xff]
        %v236 = vld [vmem:[%s134 + $0x48] sm:$0xff]
        %v237 = vld [vmem:[%s134 + $0x50] sm:$0xff]
        %v238 = vld [vmem:[%s134 + $0x58] sm:$0xff]
        %v239 = vld [vmem:[%s134 + $0x60] sm:$0xff]
        %v240 = vld [vmem:[%s134 + $0x68] sm:$0xff]
        %v241 = vld [vmem:[%s134 + $0x70] sm:$0xff]
        %v242 = vld [vmem:[%s134 + $0x78] sm:$0xff]
        %v243 = vld [vmem:[%s134 + $0x80] sm:$0xff]
        %v244 = vld [vmem:[%s134 + $0x88] sm:$0xff]
        %v245 = vld [vmem:[%s134 + $0x90] sm:$0xff]
        %v246 = vld [vmem:[%s134 + $0x98] sm:$0xff]
        %v247 = vld [vmem:[%s134 + $0xa0] sm:$0xff]
        %v248 = vld [vmem:[%s134 + $0xa8] sm:$0xff]
        %v249 = vld [vmem:[%s134 + $0xb0] sm:$0xff]
        %v250 = vld [vmem:[%s134 + $0xb8] sm:$0xff]
        %v251 = vld [vmem:[%s134 + $0xc0] sm:$0xff]
        %v252 = vld [vmem:[%s134 + $0xc8] sm:$0xff]
        %v253 = vld [vmem:[%s134 + $0xd0] sm:$0xff]
        %v254 = vld [vmem:[%s134 + $0xd8] sm:$0xff]
        %v255 = vld [vmem:[%s134 + $0xe0] sm:$0xff]
        %v256 = vld [vmem:[%s134 + $0xe8] sm:$0xff]
        %v257 = vld [vmem:[%s134 + $0xf0] sm:$0xff]
        %v258 = vld [vmem:[%s134 + $0xf8] sm:$0xff]
        %259 = vst [vmem:[#allocation2 + $0x6] sm:$0xff] %v227
        %260 = vst [vmem:[#allocation2 + $0xe] sm:$0xff] %v228
        %261 = vst [vmem:[#allocation2 + $0x26] sm:$0xff] %v229
        %262 = vst [vmem:[#allocation2 + $0x2e] sm:$0xff] %v230
        %263 = vst [vmem:[#allocation2 + $0x46] sm:$0xff] %v231
        %264 = vst [vmem:[#allocation2 + $0x4e] sm:$0xff] %v232
        %265 = vst [vmem:[#allocation2 + $0x66] sm:$0xff] %v233
        %266 = vst [vmem:[#allocation2 + $0x6e] sm:$0xff] %v234
        %267 = vst [vmem:[#allocation2 + $0x86] sm:$0xff] %v235
        %268 = vst [vmem:[#allocation2 + $0x8e] sm:$0xff] %v236
        %269 = vst [vmem:[#allocation2 + $0xa6] sm:$0xff] %v237
        %270 = vst [vmem:[#allocation2 + $0xae] sm:$0xff] %v238
        %271 = vst [vmem:[#allocation2 + $0xc6] sm:$0xff] %v239
        %272 = vst [vmem:[#allocation2 + $0xce] sm:$0xff] %v240
        %273 = vst [vmem:[#allocation2 + $0xe6] sm:$0xff] %v241
        %274 = vst [vmem:[#allocation2 + $0xee] sm:$0xff] %v242
        %275 = vst [vmem:[#allocation2 + $0x106] sm:$0xff] %v243
        %276 = vst [vmem:[#allocation2 + $0x10e] sm:$0xff] %v244
        %277 = vst [vmem:[#allocation2 + $0x126] sm:$0xff] %v245
        %278 = vst [vmem:[#allocation2 + $0x12e] sm:$0xff] %v246
        %279 = vst [vmem:[#allocation2 + $0x146] sm:$0xff] %v247
        %280 = vst [vmem:[#allocation2 + $0x14e] sm:$0xff] %v248
        %281 = vst [vmem:[#allocation2 + $0x166] sm:$0xff] %v249
        %282 = vst [vmem:[#allocation2 + $0x16e] sm:$0xff] %v250
        %283 = vst [vmem:[#allocation2 + $0x186] sm:$0xff] %v251
        %284 = vst [vmem:[#allocation2 + $0x18e] sm:$0xff] %v252
        %285 = vst [vmem:[#allocation2 + $0x1a6] sm:$0xff] %v253
        %286 = vst [vmem:[#allocation2 + $0x1ae] sm:$0xff] %v254
        %287 = vst [vmem:[#allocation2 + $0x1c6] sm:$0xff] %v255
        %288 = vst [vmem:[#allocation2 + $0x1ce] sm:$0xff] %v256
        %289 = vst [vmem:[#allocation2 + $0x1e6] sm:$0xff] %v257
        %290 = vst [vmem:[#allocation2 + $0x1ee] sm:$0xff] %v258
        %v291 = vld [vmem:[#allocation2] sm:$0xff]
        %v292 = vld [vmem:[#allocation2 + $0x8] sm:$0xff]
        %v293 = vld [vmem:[#allocation2 + $0x10] sm:$0xff]
        %v294 = vld [vmem:[#allocation2 + $0x18] sm:$0x3]
        %v295 = vld [vmem:[#allocation2 + $0x20] sm:$0xff]
        %v296 = vld [vmem:[#allocation2 + $0x28] sm:$0xff]
        %v297 = vld [vmem:[#allocation2 + $0x30] sm:$0xff]
        %v298 = vld [vmem:[#allocation2 + $0x38] sm:$0x3]
        %v299 = vld [vmem:[#allocation2 + $0x40] sm:$0xff]
        %v300 = vld [vmem:[#allocation2 + $0x48] sm:$0xff]
        %v301 = vld [vmem:[#allocation2 + $0x50] sm:$0xff]
        %v302 = vld [vmem:[#allocation2 + $0x58] sm:$0x3]
        %v303 = vld [vmem:[#allocation2 + $0x60] sm:$0xff]
        %v304 = vld [vmem:[#allocation2 + $0x68] sm:$0xff]
        %v305 = vld [vmem:[#allocation2 + $0x70] sm:$0xff]
        %v306 = vld [vmem:[#allocation2 + $0x78] sm:$0x3]
        %v307 = vld [vmem:[#allocation2 + $0x80] sm:$0xff]
        %v308 = vld [vmem:[#allocation2 + $0x88] sm:$0xff]
        %v309 = vld [vmem:[#allocation2 + $0x90] sm:$0xff]
        %v310 = vld [vmem:[#allocation2 + $0x98] sm:$0x3]
        %v311 = vld [vmem:[#allocation2 + $0xa0] sm:$0xff]
        %v312 = vld [vmem:[#allocation2 + $0xa8] sm:$0xff]
        %v313 = vld [vmem:[#allocation2 + $0xb0] sm:$0xff]
        %v314 = vld [vmem:[#allocation2 + $0xb8] sm:$0x3]
        %v315 = vld [vmem:[#allocation2 + $0xc0] sm:$0xff]
        %v316 = vld [vmem:[#allocation2 + $0xc8] sm:$0xff]
        %v317 = vld [vmem:[#allocation2 + $0xd0] sm:$0xff]
        %v318 = vld [vmem:[#allocation2 + $0xd8] sm:$0x3]
        %v319 = vld [vmem:[#allocation2 + $0xe0] sm:$0xff]
        %v320 = vld [vmem:[#allocation2 + $0xe8] sm:$0xff]
        %v321 = vld [vmem:[#allocation2 + $0xf0] sm:$0xff]
        %v322 = vld [vmem:[#allocation2 + $0xf8] sm:$0x3]
        %v323 = vld [vmem:[#allocation2 + $0x100] sm:$0xff]
        %v324 = vld [vmem:[#allocation2 + $0x108] sm:$0xff]
        %v325 = vld [vmem:[#allocation2 + $0x110] sm:$0xff]
        %v326 = vld [vmem:[#allocation2 + $0x118] sm:$0x3]
        %v327 = vld [vmem:[#allocation2 + $0x120] sm:$0xff]
        %v328 = vld [vmem:[#allocation2 + $0x128] sm:$0xff]
        %v329 = vld [vmem:[#allocation2 + $0x130] sm:$0xff]
        %v330 = vld [vmem:[#allocation2 + $0x138] sm:$0x3]
        %v331 = vld [vmem:[#allocation2 + $0x140] sm:$0xff]
        %v332 = vld [vmem:[#allocation2 + $0x148] sm:$0xff]
        %v333 = vld [vmem:[#allocation2 + $0x150] sm:$0xff]
        %v334 = vld [vmem:[#allocation2 + $0x158] sm:$0x3]
        %v335 = vld [vmem:[#allocation2 + $0x160] sm:$0xff]
        %v336 = vld [vmem:[#allocation2 + $0x168] sm:$0xff]
        %v337 = vld [vmem:[#allocation2 + $0x170] sm:$0xff]
        %v338 = vld [vmem:[#allocation2 + $0x178] sm:$0x3]
        %v339 = vld [vmem:[#allocation2 + $0x180] sm:$0xff]
        %v340 = vld [vmem:[#allocation2 + $0x188] sm:$0xff]
        %v341 = vld [vmem:[#allocation2 + $0x190] sm:$0xff]
        %v342 = vld [vmem:[#allocation2 + $0x198] sm:$0x3]
        %v343 = vld [vmem:[#allocation2 + $0x1a0] sm:$0xff]
        %v344 = vld [vmem:[#allocation2 + $0x1a8] sm:$0xff]
        %v345 = vld [vmem:[#allocation2 + $0x1b0] sm:$0xff]
        %v346 = vld [vmem:[#allocation2 + $0x1b8] sm:$0x3]
        %v347 = vld [vmem:[#allocation2 + $0x1c0] sm:$0xff]
        %v348 = vld [vmem:[#allocation2 + $0x1c8] sm:$0xff]
        %v349 = vld [vmem:[#allocation2 + $0x1d0] sm:$0xff]
        %v350 = vld [vmem:[#allocation2 + $0x1d8] sm:$0x3]
        %v351 = vld [vmem:[#allocation2 + $0x1e0] sm:$0xff]
        %v352 = vld [vmem:[#allocation2 + $0x1e8] sm:$0xff]
        %v353 = vld [vmem:[#allocation2 + $0x1f0] sm:$0xff]
        %v354 = vld [vmem:[#allocation2 + $0x1f8] sm:$0x3]
        %v355 = vld [vmem:[#allocation2 + $0x1] sm:$0xff]
        %v356 = vld [vmem:[#allocation2 + $0x9] sm:$0xff]
        %v357 = vld [vmem:[#allocation2 + $0x11] sm:$0xff]
        %v358 = vld [vmem:[#allocation2 + $0x19] sm:$0x3]
        %v359 = vld [vmem:[#allocation2 + $0x21] sm:$0xff]
        %v360 = vld [vmem:[#allocation2 + $0x29] sm:$0xff]
        %v361 = vld [vmem:[#allocation2 + $0x31] sm:$0xff]
        %v362 = vld [vmem:[#allocation2 + $0x39] sm:$0x3]
        %v363 = vld [vmem:[#allocation2 + $0x41] sm:$0xff]
        %v364 = vld [vmem:[#allocation2 + $0x49] sm:$0xff]
        %v365 = vld [vmem:[#allocation2 + $0x51] sm:$0xff]
        %v366 = vld [vmem:[#allocation2 + $0x59] sm:$0x3]
        %v367 = vld [vmem:[#allocation2 + $0x61] sm:$0xff]
        %v368 = vld [vmem:[#allocation2 + $0x69] sm:$0xff]
        %v369 = vld [vmem:[#allocation2 + $0x71] sm:$0xff]
        %v370 = vld [vmem:[#allocation2 + $0x79] sm:$0x3]
        %v371 = vld [vmem:[#allocation2 + $0x81] sm:$0xff]
        %v372 = vld [vmem:[#allocation2 + $0x89] sm:$0xff]
        %v373 = vld [vmem:[#allocation2 + $0x91] sm:$0xff]
        %v374 = vld [vmem:[#allocation2 + $0x99] sm:$0x3]
        %v375 = vld [vmem:[#allocation2 + $0xa1] sm:$0xff]
        %v376 = vld [vmem:[#allocation2 + $0xa9] sm:$0xff]
        %v377 = vld [vmem:[#allocation2 + $0xb1] sm:$0xff]
        %v378 = vld [vmem:[#allocation2 + $0xb9] sm:$0x3]
        %v379 = vld [vmem:[#allocation2 + $0xc1] sm:$0xff]
        %v380 = vld [vmem:[#allocation2 + $0xc9] sm:$0xff]
        %v381 = vld [vmem:[#allocation2 + $0xd1] sm:$0xff]
        %v382 = vld [vmem:[#allocation2 + $0xd9] sm:$0x3]
        %v383 = vld [vmem:[#allocation2 + $0xe1] sm:$0xff]
        %v384 = vld [vmem:[#allocation2 + $0xe9] sm:$0xff]
        %v385 = vld [vmem:[#allocation2 + $0xf1] sm:$0xff]
        %v386 = vld [vmem:[#allocation2 + $0xf9] sm:$0x3]
        %v387 = vld [vmem:[#allocation2 + $0x101] sm:$0xff]
        %v388 = vld [vmem:[#allocation2 + $0x109] sm:$0xff]
        %v389 = vld [vmem:[#allocation2 + $0x111] sm:$0xff]
        %v390 = vld [vmem:[#allocation2 + $0x119] sm:$0x3]
        %v391 = vld [vmem:[#allocation2 + $0x121] sm:$0xff]
        %v392 = vld [vmem:[#allocation2 + $0x129] sm:$0xff]
        %v393 = vld [vmem:[#allocation2 + $0x131] sm:$0xff]
        %v394 = vld [vmem:[#allocation2 + $0x139] sm:$0x3]
        %v395 = vld [vmem:[#allocation2 + $0x141] sm:$0xff]
        %v396 = vld [vmem:[#allocation2 + $0x149] sm:$0xff]
        %v397 = vld [vmem:[#allocation2 + $0x151] sm:$0xff]
        %v398 = vld [vmem:[#allocation2 + $0x159] sm:$0x3]
        %v399 = vld [vmem:[#allocation2 + $0x161] sm:$0xff]
        %v400 = vld [vmem:[#allocation2 + $0x169] sm:$0xff]
        %v401 = vld [vmem:[#allocation2 + $0x171] sm:$0xff]
        %v402 = vld [vmem:[#allocation2 + $0x179] sm:$0x3]
        %v403 = vld [vmem:[#allocation2 + $0x181] sm:$0xff]
        %v404 = vld [vmem:[#allocation2 + $0x189] sm:$0xff]
        %v405 = vld [vmem:[#allocation2 + $0x191] sm:$0xff]
        %v406 = vld [vmem:[#allocation2 + $0x199] sm:$0x3]
        %v407 = vld [vmem:[#allocation2 + $0x1a1] sm:$0xff]
        %v408 = vld [vmem:[#allocation2 + $0x1a9] sm:$0xff]
        %v409 = vld [vmem:[#allocation2 + $0x1b1] sm:$0xff]
        %v410 = vld [vmem:[#allocation2 + $0x1b9] sm:$0x3]
        %v411 = vld [vmem:[#allocation2 + $0x1c1] sm:$0xff]
        %v412 = vld [vmem:[#allocation2 + $0x1c9] sm:$0xff]
        %v413 = vld [vmem:[#allocation2 + $0x1d1] sm:$0xff]
        %v414 = vld [vmem:[#allocation2 + $0x1d9] sm:$0x3]
        %v415 = vld [vmem:[#allocation2 + $0x1e1] sm:$0xff]
        %v416 = vld [vmem:[#allocation2 + $0x1e9] sm:$0xff]
        %v417 = vld [vmem:[#allocation2 + $0x1f1] sm:$0xff]
        %v418 = vld [vmem:[#allocation2 + $0x1f9] sm:$0x3]
        %v419 = vmax.f32 %v291, %v355
        %v420 = vmax.f32 %v292, %v356
        %v421 = vmax.f32 %v293, %v357
        %v422 = vmax.f32 %v294, %v358
        %v423 = vmax.f32 %v295, %v359
        %v424 = vmax.f32 %v296, %v360
        %v425 = vmax.f32 %v297, %v361
        %v426 = vmax.f32 %v298, %v362
        %v427 = vmax.f32 %v299, %v363
        %v428 = vmax.f32 %v300, %v364
        %v429 = vmax.f32 %v301, %v365
        %v430 = vmax.f32 %v302, %v366
        %v431 = vmax.f32 %v303, %v367
        %v432 = vmax.f32 %v304, %v368
        %v433 = vmax.f32 %v305, %v369
        %v434 = vmax.f32 %v306, %v370
        %v435 = vmax.f32 %v307, %v371
        %v436 = vmax.f32 %v308, %v372
        %v437 = vmax.f32 %v309, %v373
        %v438 = vmax.f32 %v310, %v374
        %v439 = vmax.f32 %v311, %v375
        %v440 = vmax.f32 %v312, %v376
        %v441 = vmax.f32 %v313, %v377
        %v442 = vmax.f32 %v314, %v378
        %v443 = vmax.f32 %v315, %v379
        %v444 = vmax.f32 %v316, %v380
        %v445 = vmax.f32 %v317, %v381
        %v446 = vmax.f32 %v318, %v382
        %v447 = vmax.f32 %v319, %v383
        %v448 = vmax.f32 %v320, %v384
        %v449 = vmax.f32 %v321, %v385
        %v450 = vmax.f32 %v322, %v386
        %v451 = vmax.f32 %v323, %v387
        %v452 = vmax.f32 %v324, %v388
        %v453 = vmax.f32 %v325, %v389
        %v454 = vmax.f32 %v326, %v390
        %v455 = vmax.f32 %v327, %v391
        %v456 = vmax.f32 %v328, %v392
        %v457 = vmax.f32 %v329, %v393
        %v458 = vmax.f32 %v330, %v394
        %v459 = vmax.f32 %v331, %v395
        %v460 = vmax.f32 %v332, %v396
        %v461 = vmax.f32 %v333, %v397
        %v462 = vmax.f32 %v334, %v398
        %v463 = vmax.f32 %v335, %v399
        %v464 = vmax.f32 %v336, %v400
        %v465 = vmax.f32 %v337, %v401
        %v466 = vmax.f32 %v338, %v402
        %v467 = vmax.f32 %v339, %v403
        %v468 = vmax.f32 %v340, %v404
        %v469 = vmax.f32 %v341, %v405
        %v470 = vmax.f32 %v342, %v406
        %v471 = vmax.f32 %v343, %v407
        %v472 = vmax.f32 %v344, %v408
        %v473 = vmax.f32 %v345, %v409
        %v474 = vmax.f32 %v346, %v410
        %v475 = vmax.f32 %v347, %v411
        %v476 = vmax.f32 %v348, %v412
        %v477 = vmax.f32 %v349, %v413
        %v478 = vmax.f32 %v350, %v414
        %v479 = vmax.f32 %v351, %v415
        %v480 = vmax.f32 %v352, %v416
        %v481 = vmax.f32 %v353, %v417
        %v482 = vmax.f32 %v354, %v418
        %vm547 = vcmask 1045504
        %v548 = vrot.slane %v419, 2
        %v549 = vrot.slane %v420, 2
        %v550 = vsel %vm547, %v548, %v549
        %v551 = vrot.slane %v421, 2
        %v552 = vsel %vm547, %v549, %v551
        %v553 = vrot.slane %v422, 2
        %v554 = vsel %vm547, %v551, %v553
        %v555 = vrot.slane %v423, 2
        %v556 = vrot.slane %v424, 2
        %v557 = vsel %vm547, %v555, %v556
        %v558 = vrot.slane %v425, 2
        %v559 = vsel %vm547, %v556, %v558
        %v560 = vrot.slane %v426, 2
        %v561 = vsel %vm547, %v558, %v560
        %v562 = vrot.slane %v427, 2
        %v563 = vrot.slane %v428, 2
        %v564 = vsel %vm547, %v562, %v563
        %v565 = vrot.slane %v429, 2
        %v566 = vsel %vm547, %v563, %v565
        %v567 = vrot.slane %v430, 2
        %v568 = vsel %vm547, %v565, %v567
        %v569 = vrot.slane %v431, 2
        %v570 = vrot.slane %v432, 2
        %v571 = vsel %vm547, %v569, %v570
        %v572 = vrot.slane %v433, 2
        %v573 = vsel %vm547, %v570, %v572
        %v574 = vrot.slane %v434, 2
        %v575 = vsel %vm547, %v572, %v574
        %v576 = vrot.slane %v435, 2
        %v577 = vrot.slane %v436, 2
        %v578 = vsel %vm547, %v576, %v577
        %v579 = vrot.slane %v437, 2
        %v580 = vsel %vm547, %v577, %v579
        %v581 = vrot.slane %v438, 2
        %v582 = vsel %vm547, %v579, %v581
        %v583 = vrot.slane %v439, 2
        %v584 = vrot.slane %v440, 2
        %v585 = vsel %vm547, %v583, %v584
        %v586 = vrot.slane %v441, 2
        %v587 = vsel %vm547, %v584, %v586
        %v588 = vrot.slane %v442, 2
        %v589 = vsel %vm547, %v586, %v588
        %v590 = vrot.slane %v443, 2
        %v591 = vrot.slane %v444, 2
        %v592 = vsel %vm547, %v590, %v591
        %v593 = vrot.slane %v445, 2
        %v594 = vsel %vm547, %v591, %v593
        %v595 = vrot.slane %v446, 2
        %v596 = vsel %vm547, %v593, %v595
        %v597 = vrot.slane %v447, 2
        %v598 = vrot.slane %v448, 2
        %v599 = vsel %vm547, %v597, %v598
        %v600 = vrot.slane %v449, 2
        %v601 = vsel %vm547, %v598, %v600
        %v602 = vrot.slane %v450, 2
        %v603 = vsel %vm547, %v600, %v602
        %v604 = vrot.slane %v451, 2
        %v605 = vrot.slane %v452, 2
        %v606 = vsel %vm547, %v604, %v605
        %v607 = vrot.slane %v453, 2
        %v608 = vsel %vm547, %v605, %v607
        %v609 = vrot.slane %v454, 2
        %v610 = vsel %vm547, %v607, %v609
        %v611 = vrot.slane %v455, 2
        %v612 = vrot.slane %v456, 2
        %v613 = vsel %vm547, %v611, %v612
        %v614 = vrot.slane %v457, 2
        %v615 = vsel %vm547, %v612, %v614
        %v616 = vrot.slane %v458, 2
        %v617 = vsel %vm547, %v614, %v616
        %v618 = vrot.slane %v459, 2
        %v619 = vrot.slane %v460, 2
        %v620 = vsel %vm547, %v618, %v619
        %v621 = vrot.slane %v461, 2
        %v622 = vsel %vm547, %v619, %v621
        %v623 = vrot.slane %v462, 2
        %v624 = vsel %vm547, %v621, %v623
        %v625 = vrot.slane %v463, 2
        %v626 = vrot.slane %v464, 2
        %v627 = vsel %vm547, %v625, %v626
        %v628 = vrot.slane %v465, 2
        %v629 = vsel %vm547, %v626, %v628
        %v630 = vrot.slane %v466, 2
        %v631 = vsel %vm547, %v628, %v630
        %v632 = vrot.slane %v467, 2
        %v633 = vrot.slane %v468, 2
        %v634 = vsel %vm547, %v632, %v633
        %v635 = vrot.slane %v469, 2
        %v636 = vsel %vm547, %v633, %v635
        %v637 = vrot.slane %v470, 2
        %v638 = vsel %vm547, %v635, %v637
        %v639 = vrot.slane %v471, 2
        %v640 = vrot.slane %v472, 2
        %v641 = vsel %vm547, %v639, %v640
        %v642 = vrot.slane %v473, 2
        %v643 = vsel %vm547, %v640, %v642
        %v644 = vrot.slane %v474, 2
        %v645 = vsel %vm547, %v642, %v644
        %v646 = vrot.slane %v475, 2
        %v647 = vrot.slane %v476, 2
        %v648 = vsel %vm547, %v646, %v647
        %v649 = vrot.slane %v477, 2
        %v650 = vsel %vm547, %v647, %v649
        %v651 = vrot.slane %v478, 2
        %v652 = vsel %vm547, %v649, %v651
        %v653 = vrot.slane %v479, 2
        %v654 = vrot.slane %v480, 2
        %v655 = vsel %vm547, %v653, %v654
        %v656 = vrot.slane %v481, 2
        %v657 = vsel %vm547, %v654, %v656
        %v658 = vrot.slane %v482, 2
        %v659 = vsel %vm547, %v656, %v658
        %v708 = vmax.f32 %v419, %v550
        %v709 = vmax.f32 %v420, %v552
        %v710 = vmax.f32 %v421, %v554
        %v711 = vmax.f32 %v423, %v557
        %v712 = vmax.f32 %v424, %v559
        %v713 = vmax.f32 %v425, %v561
        %v714 = vmax.f32 %v427, %v564
        %v715 = vmax.f32 %v428, %v566
        %v716 = vmax.f32 %v429, %v568
        %v717 = vmax.f32 %v431, %v571
        %v718 = vmax.f32 %v432, %v573
        %v719 = vmax.f32 %v433, %v575
        %v720 = vmax.f32 %v435, %v578
        %v721 = vmax.f32 %v436, %v580
        %v722 = vmax.f32 %v437, %v582
        %v723 = vmax.f32 %v439, %v585
        %v724 = vmax.f32 %v440, %v587
        %v725 = vmax.f32 %v441, %v589
        %v726 = vmax.f32 %v443, %v592
        %v727 = vmax.f32 %v444, %v594
        %v728 = vmax.f32 %v445, %v596
        %v729 = vmax.f32 %v447, %v599
        %v730 = vmax.f32 %v448, %v601
        %v731 = vmax.f32 %v449, %v603
        %v732 = vmax.f32 %v451, %v606
        %v733 = vmax.f32 %v452, %v608
        %v734 = vmax.f32 %v453, %v610
        %v735 = vmax.f32 %v455, %v613
        %v736 = vmax.f32 %v456, %v615
        %v737 = vmax.f32 %v457, %v617
        %v738 = vmax.f32 %v459, %v620
        %v739 = vmax.f32 %v460, %v622
        %v740 = vmax.f32 %v461, %v624
        %v741 = vmax.f32 %v463, %v627
        %v742 = vmax.f32 %v464, %v629
        %v743 = vmax.f32 %v465, %v631
        %v744 = vmax.f32 %v467, %v634
        %v745 = vmax.f32 %v468, %v636
        %v746 = vmax.f32 %v469, %v638
        %v747 = vmax.f32 %v471, %v641
        %v748 = vmax.f32 %v472, %v643
        %v749 = vmax.f32 %v473, %v645
        %v750 = vmax.f32 %v475, %v648
        %v751 = vmax.f32 %v476, %v650
        %v752 = vmax.f32 %v477, %v652
        %v753 = vmax.f32 %v479, %v655
        %v754 = vmax.f32 %v480, %v657
        %v755 = vmax.f32 %v481, %v659
        %v756 = vld [vmem:[#allocation2 + $0x4] sm:$0xff]
        %v757 = vld [vmem:[#allocation2 + $0xc] sm:$0xff]
        %v758 = vld [vmem:[#allocation2 + $0x14] sm:$0xff]
        %v759 = vld [vmem:[#allocation2 + $0x24] sm:$0xff]
        %v760 = vld [vmem:[#allocation2 + $0x2c] sm:$0xff]
        %v761 = vld [vmem:[#allocation2 + $0x34] sm:$0xff]
        %v762 = vld [vmem:[#allocation2 + $0x44] sm:$0xff]
        %v763 = vld [vmem:[#allocation2 + $0x4c] sm:$0xff]
        %v764 = vld [vmem:[#allocation2 + $0x54] sm:$0xff]
        %v765 = vld [vmem:[#allocation2 + $0x64] sm:$0xff]
        %v766 = vld [vmem:[#allocation2 + $0x6c] sm:$0xff]
        %v767 = vld [vmem:[#allocation2 + $0x74] sm:$0xff]
        %v768 = vld [vmem:[#allocation2 + $0x84] sm:$0xff]
        %v769 = vld [vmem:[#allocation2 + $0x8c] sm:$0xff]
        %v770 = vld [vmem:[#allocation2 + $0x94] sm:$0xff]
        %v771 = vld [vmem:[#allocation2 + $0xa4] sm:$0xff]
        %v772 = vld [vmem:[#allocation2 + $0xac] sm:$0xff]
        %v773 = vld [vmem:[#allocation2 + $0xb4] sm:$0xff]
        %v774 = vld [vmem:[#allocation2 + $0xc4] sm:$0xff]
        %v775 = vld [vmem:[#allocation2 + $0xcc] sm:$0xff]
        %v776 = vld [vmem:[#allocation2 + $0xd4] sm:$0xff]
        %v777 = vld [vmem:[#allocation2 + $0xe4] sm:$0xff]
        %v778 = vld [vmem:[#allocation2 + $0xec] sm:$0xff]
        %v779 = vld [vmem:[#allocation2 + $0xf4] sm:$0xff]
        %v780 = vld [vmem:[#allocation2 + $0x104] sm:$0xff]
        %v781 = vld [vmem:[#allocation2 + $0x10c] sm:$0xff]
        %v782 = vld [vmem:[#allocation2 + $0x114] sm:$0xff]
        %v783 = vld [vmem:[#allocation2 + $0x124] sm:$0xff]
        %v784 = vld [vmem:[#allocation2 + $0x12c] sm:$0xff]
        %v785 = vld [vmem:[#allocation2 + $0x134] sm:$0xff]
        %v786 = vld [vmem:[#allocation2 + $0x144] sm:$0xff]
        %v787 = vld [vmem:[#allocation2 + $0x14c] sm:$0xff]
        %v788 = vld [vmem:[#allocation2 + $0x154] sm:$0xff]
        %v789 = vld [vmem:[#allocation2 + $0x164] sm:$0xff]
        %v790 = vld [vmem:[#allocation2 + $0x16c] sm:$0xff]
        %v791 = vld [vmem:[#allocation2 + $0x174] sm:$0xff]
        %v792 = vld [vmem:[#allocation2 + $0x184] sm:$0xff]
        %v793 = vld [vmem:[#allocation2 + $0x18c] sm:$0xff]
        %v794 = vld [vmem:[#allocation2 + $0x194] sm:$0xff]
        %v795 = vld [vmem:[#allocation2 + $0x1a4] sm:$0xff]
        %v796 = vld [vmem:[#allocation2 + $0x1ac] sm:$0xff]
        %v797 = vld [vmem:[#allocation2 + $0x1b4] sm:$0xff]
        %v798 = vld [vmem:[#allocation2 + $0x1c4] sm:$0xff]
        %v799 = vld [vmem:[#allocation2 + $0x1cc] sm:$0xff]
        %v800 = vld [vmem:[#allocation2 + $0x1d4] sm:$0xff]
        %v801 = vld [vmem:[#allocation2 + $0x1e4] sm:$0xff]
        %v802 = vld [vmem:[#allocation2 + $0x1ec] sm:$0xff]
        %v803 = vld [vmem:[#allocation2 + $0x1f4] sm:$0xff]
        %v804 = vmax.f32 %v708, %v756
        %v805 = vmax.f32 %v709, %v757
        %v806 = vmax.f32 %v710, %v758
        %v807 = vmax.f32 %v711, %v759
        %v808 = vmax.f32 %v712, %v760
        %v809 = vmax.f32 %v713, %v761
        %v810 = vmax.f32 %v714, %v762
        %v811 = vmax.f32 %v715, %v763
        %v812 = vmax.f32 %v716, %v764
        %v813 = vmax.f32 %v717, %v765
        %v814 = vmax.f32 %v718, %v766
        %v815 = vmax.f32 %v719, %v767
        %v816 = vmax.f32 %v720, %v768
        %v817 = vmax.f32 %v721, %v769
        %v818 = vmax.f32 %v722, %v770
        %v819 = vmax.f32 %v723, %v771
        %v820 = vmax.f32 %v724, %v772
        %v821 = vmax.f32 %v725, %v773
        %v822 = vmax.f32 %v726, %v774
        %v823 = vmax.f32 %v727, %v775
        %v824 = vmax.f32 %v728, %v776
        %v825 = vmax.f32 %v729, %v777
        %v826 = vmax.f32 %v730, %v778
        %v827 = vmax.f32 %v731, %v779
        %v828 = vmax.f32 %v732, %v780
        %v829 = vmax.f32 %v733, %v781
        %v830 = vmax.f32 %v734, %v782
        %v831 = vmax.f32 %v735, %v783
        %v832 = vmax.f32 %v736, %v784
        %v833 = vmax.f32 %v737, %v785
        %v834 = vmax.f32 %v738, %v786
        %v835 = vmax.f32 %v739, %v787
        %v836 = vmax.f32 %v740, %v788
        %v837 = vmax.f32 %v741, %v789
        %v838 = vmax.f32 %v742, %v790
        %v839 = vmax.f32 %v743, %v791
        %v840 = vmax.f32 %v744, %v792
        %v841 = vmax.f32 %v745, %v793
        %v842 = vmax.f32 %v746, %v794
        %v843 = vmax.f32 %v747, %v795
        %v844 = vmax.f32 %v748, %v796
        %v845 = vmax.f32 %v749, %v797
        %v846 = vmax.f32 %v750, %v798
        %v847 = vmax.f32 %v751, %v799
        %v848 = vmax.f32 %v752, %v800
        %v849 = vmax.f32 %v753, %v801
        %v850 = vmax.f32 %v754, %v802
        %v851 = vmax.f32 %v755, %v803
        %s852 = scalar_lea.vmem [#allocation3], 144
        %853 = vst [vmem:[%s852] sm:$0xff] %v804
        %854 = vst [vmem:[%s852 + $0x8] sm:$0xff] %v805
        %855 = vst [vmem:[%s852 + $0x10] sm:$0xff] %v806
        %856 = vst [vmem:[%s852 + $0x18] sm:$0xff] %v807
        %857 = vst [vmem:[%s852 + $0x20] sm:$0xff] %v808
        %858 = vst [vmem:[%s852 + $0x28] sm:$0xff] %v809
        %859 = vst [vmem:[%s852 + $0x30] sm:$0xff] %v810
        %860 = vst [vmem:[%s852 + $0x38] sm:$0xff] %v811
        %861 = vst [vmem:[%s852 + $0x40] sm:$0xff] %v812
        %862 = vst [vmem:[%s852 + $0x48] sm:$0xff] %v813
        %863 = vst [vmem:[%s852 + $0x50] sm:$0xff] %v814
        %864 = vst [vmem:[%s852 + $0x58] sm:$0xff] %v815
        %865 = vst [vmem:[%s852 + $0x60] sm:$0xff] %v816
        %866 = vst [vmem:[%s852 + $0x68] sm:$0xff] %v817
        %867 = vst [vmem:[%s852 + $0x70] sm:$0xff] %v818
        %868 = vst [vmem:[%s852 + $0x78] sm:$0xff] %v819
        %869 = vst [vmem:[%s852 + $0x80] sm:$0xff] %v820
        %870 = vst [vmem:[%s852 + $0x88] sm:$0xff] %v821
        %871 = vst [vmem:[%s852 + $0x90] sm:$0xff] %v822
        %872 = vst [vmem:[%s852 + $0x98] sm:$0xff] %v823
        %873 = vst [vmem:[%s852 + $0xa0] sm:$0xff] %v824
        %874 = vst [vmem:[%s852 + $0xa8] sm:$0xff] %v825
        %875 = vst [vmem:[%s852 + $0xb0] sm:$0xff] %v826
        %876 = vst [vmem:[%s852 + $0xb8] sm:$0xff] %v827
        %877 = vst [vmem:[%s852 + $0xc0] sm:$0xff] %v828
        %878 = vst [vmem:[%s852 + $0xc8] sm:$0xff] %v829
        %879 = vst [vmem:[%s852 + $0xd0] sm:$0xff] %v830
        %880 = vst [vmem:[%s852 + $0xd8] sm:$0xff] %v831
        %881 = vst [vmem:[%s852 + $0xe0] sm:$0xff] %v832
        %882 = vst [vmem:[%s852 + $0xe8] sm:$0xff] %v833
        %883 = vst [vmem:[%s852 + $0xf0] sm:$0xff] %v834
        %884 = vst [vmem:[%s852 + $0xf8] sm:$0xff] %v835
        %885 = vst [vmem:[%s852 + $0x100] sm:$0xff] %v836
        %886 = vst [vmem:[%s852 + $0x108] sm:$0xff] %v837
        %887 = vst [vmem:[%s852 + $0x110] sm:$0xff] %v838
        %888 = vst [vmem:[%s852 + $0x118] sm:$0xff] %v839
        %889 = vst [vmem:[%s852 + $0x120] sm:$0xff] %v840
        %890 = vst [vmem:[%s852 + $0x128] sm:$0xff] %v841
        %891 = vst [vmem:[%s852 + $0x130] sm:$0xff] %v842
        %892 = vst [vmem:[%s852 + $0x138] sm:$0xff] %v843
        %893 = vst [vmem:[%s852 + $0x140] sm:$0xff] %v844
        %894 = vst [vmem:[%s852 + $0x148] sm:$0xff] %v845
        %895 = vst [vmem:[%s852 + $0x150] sm:$0xff] %v846
        %896 = vst [vmem:[%s852 + $0x158] sm:$0xff] %v847
        %897 = vst [vmem:[%s852 + $0x160] sm:$0xff] %v848
        %898 = vst [vmem:[%s852 + $0x168] sm:$0xff] %v849
        %899 = vst [vmem:[%s852 + $0x170] sm:$0xff] %v850
        %900 = vst [vmem:[%s852 + $0x178] sm:$0xff] %v851
        %v901 = vld [vmem:[#allocation3] sm:$0xff]
        %v902 = vld [vmem:[#allocation3 + $0x8] sm:$0xff]
        %v903 = vld [vmem:[#allocation3 + $0x10] sm:$0xff]
        %v904 = vld [vmem:[#allocation3 + $0x18] sm:$0xff]
        %v905 = vld [vmem:[#allocation3 + $0x20] sm:$0xff]
        %v906 = vld [vmem:[#allocation3 + $0x28] sm:$0xff]
        %v907 = vld [vmem:[#allocation3 + $0x30] sm:$0xff]
        %v908 = vld [vmem:[#allocation3 + $0x38] sm:$0xff]
        %v909 = vld [vmem:[#allocation3 + $0x40] sm:$0xff]
        %v910 = vld [vmem:[#allocation3 + $0x48] sm:$0xff]
        %v911 = vld [vmem:[#allocation3 + $0x50] sm:$0xff]
        %v912 = vld [vmem:[#allocation3 + $0x58] sm:$0xff]
        %v913 = vld [vmem:[#allocation3 + $0x60] sm:$0xff]
        %v914 = vld [vmem:[#allocation3 + $0x68] sm:$0xff]
        %v915 = vld [vmem:[#allocation3 + $0x70] sm:$0xff]
        %v916 = vld [vmem:[#allocation3 + $0x78] sm:$0xff]
        %v917 = vld [vmem:[#allocation3 + $0x80] sm:$0xff]
        %v918 = vld [vmem:[#allocation3 + $0x88] sm:$0xff]
        %v919 = vld [vmem:[#allocation3 + $0x90] sm:$0xff]
        %v920 = vld [vmem:[#allocation3 + $0x98] sm:$0xff]
        %v921 = vld [vmem:[#allocation3 + $0xa0] sm:$0xff]
        %v922 = vld [vmem:[#allocation3 + $0xa8] sm:$0xff]
        %v923 = vld [vmem:[#allocation3 + $0xb0] sm:$0xff]
        %v924 = vld [vmem:[#allocation3 + $0xb8] sm:$0xff]
        %v925 = vld [vmem:[#allocation3 + $0xc0] sm:$0xff]
        %v926 = vld [vmem:[#allocation3 + $0xc8] sm:$0xff]
        %v927 = vld [vmem:[#allocation3 + $0xd0] sm:$0xff]
        %v928 = vld [vmem:[#allocation3 + $0xd8] sm:$0xff]
        %v929 = vld [vmem:[#allocation3 + $0xe0] sm:$0xff]
        %v930 = vld [vmem:[#allocation3 + $0xe8] sm:$0xff]
        %v931 = vld [vmem:[#allocation3 + $0xf0] sm:$0xff]
        %v932 = vld [vmem:[#allocation3 + $0xf8] sm:$0xff]
        %v933 = vld [vmem:[#allocation3 + $0x100] sm:$0xff]
        %v934 = vld [vmem:[#allocation3 + $0x108] sm:$0xff]
        %v935 = vld [vmem:[#allocation3 + $0x110] sm:$0xff]
        %v936 = vld [vmem:[#allocation3 + $0x118] sm:$0xff]
        %v937 = vld [vmem:[#allocation3 + $0x120] sm:$0xff]
        %v938 = vld [vmem:[#allocation3 + $0x128] sm:$0xff]
        %v939 = vld [vmem:[#allocation3 + $0x130] sm:$0xff]
        %v940 = vld [vmem:[#allocation3 + $0x138] sm:$0xff]
        %v941 = vld [vmem:[#allocation3 + $0x140] sm:$0xff]
        %v942 = vld [vmem:[#allocation3 + $0x148] sm:$0xff]
        %v943 = vld [vmem:[#allocation3 + $0x150] sm:$0xff]
        %v944 = vld [vmem:[#allocation3 + $0x158] sm:$0xff]
        %v945 = vld [vmem:[#allocation3 + $0x160] sm:$0xff]
        %v946 = vld [vmem:[#allocation3 + $0x168] sm:$0xff]
        %v947 = vld [vmem:[#allocation3 + $0x170] sm:$0xff]
        %v948 = vld [vmem:[#allocation3 + $0x178] sm:$0xff]
        %v949 = vld [vmem:[#allocation3 + $0x180] sm:$0xff]
        %v950 = vld [vmem:[#allocation3 + $0x188] sm:$0xff]
        %v951 = vld [vmem:[#allocation3 + $0x190] sm:$0xff]
        %v952 = vld [vmem:[#allocation3 + $0x198] sm:$0xff]
        %v953 = vld [vmem:[#allocation3 + $0x1a0] sm:$0xff]
        %v954 = vld [vmem:[#allocation3 + $0x1a8] sm:$0xff]
        %v955 = vld [vmem:[#allocation3 + $0x1b0] sm:$0xff]
        %v956 = vld [vmem:[#allocation3 + $0x1b8] sm:$0xff]
        %v957 = vld [vmem:[#allocation3 + $0x1c0] sm:$0xff]
        %v958 = vld [vmem:[#allocation3 + $0x1c8] sm:$0xff]
        %v959 = vld [vmem:[#allocation3 + $0x1d0] sm:$0xff]
        %v960 = vld [vmem:[#allocation3 + $0x1d8] sm:$0xff]
        %v961 = vld [vmem:[#allocation3 + $0x1e0] sm:$0xff]
        %v962 = vld [vmem:[#allocation3 + $0x1e8] sm:$0xff]
        %v963 = vld [vmem:[#allocation3 + $0x1f0] sm:$0xff]
        %v964 = vld [vmem:[#allocation3 + $0x1f8] sm:$0xff]
        %v965 = vld [vmem:[#allocation3 + $0x200] sm:$0xff]
        %v966 = vld [vmem:[#allocation3 + $0x208] sm:$0xff]
        %v967 = vld [vmem:[#allocation3 + $0x210] sm:$0xff]
        %v968 = vld [vmem:[#allocation3 + $0x218] sm:$0xff]
        %v969 = vld [vmem:[#allocation3 + $0x220] sm:$0xff]
        %v970 = vld [vmem:[#allocation3 + $0x228] sm:$0xff]
        %v971 = vld [vmem:[#allocation3 + $0x230] sm:$0xff]
        %v972 = vld [vmem:[#allocation3 + $0x238] sm:$0xff]
        %v973 = vld [vmem:[#allocation3 + $0x240] sm:$0xff]
        %v974 = vld [vmem:[#allocation3 + $0x248] sm:$0xff]
        %v975 = vld [vmem:[#allocation3 + $0x250] sm:$0xff]
        %v976 = vld [vmem:[#allocation3 + $0x258] sm:$0xff]
        %v977 = vld [vmem:[#allocation3 + $0x260] sm:$0xff]
        %v978 = vld [vmem:[#allocation3 + $0x268] sm:$0xff]
        %s979 = scalar_lea.vmem [#allocation3], 24
        %v980 = vld [vmem:[%s979] sm:$0xff]
        %v981 = vld [vmem:[%s979 + $0x8] sm:$0xff]
        %v982 = vld [vmem:[%s979 + $0x10] sm:$0xff]
        %v983 = vld [vmem:[%s979 + $0x18] sm:$0xff]
        %v984 = vld [vmem:[%s979 + $0x20] sm:$0xff]
        %v985 = vld [vmem:[%s979 + $0x28] sm:$0xff]
        %v986 = vld [vmem:[%s979 + $0x30] sm:$0xff]
        %v987 = vld [vmem:[%s979 + $0x38] sm:$0xff]
        %v988 = vld [vmem:[%s979 + $0x40] sm:$0xff]
        %v989 = vld [vmem:[%s979 + $0x48] sm:$0xff]
        %v990 = vld [vmem:[%s979 + $0x50] sm:$0xff]
        %v991 = vld [vmem:[%s979 + $0x58] sm:$0xff]
        %v992 = vld [vmem:[%s979 + $0x60] sm:$0xff]
        %v993 = vld [vmem:[%s979 + $0x68] sm:$0xff]
        %v994 = vld [vmem:[%s979 + $0x70] sm:$0xff]
        %v995 = vld [vmem:[%s979 + $0x78] sm:$0xff]
        %v996 = vld [vmem:[%s979 + $0x80] sm:$0xff]
        %v997 = vld [vmem:[%s979 + $0x88] sm:$0xff]
        %v998 = vld [vmem:[%s979 + $0x90] sm:$0xff]
        %v999 = vld [vmem:[%s979 + $0x98] sm:$0xff]
        %v1000 = vld [vmem:[%s979 + $0xa0] sm:$0xff]
        %v1001 = vld [vmem:[%s979 + $0xa8] sm:$0xff]
        %v1002 = vld [vmem:[%s979 + $0xb0] sm:$0xff]
        %v1003 = vld [vmem:[%s979 + $0xb8] sm:$0xff]
        %v1004 = vld [vmem:[%s979 + $0xc0] sm:$0xff]
        %v1005 = vld [vmem:[%s979 + $0xc8] sm:$0xff]
        %v1006 = vld [vmem:[%s979 + $0xd0] sm:$0xff]
        %v1007 = vld [vmem:[%s979 + $0xd8] sm:$0xff]
        %v1008 = vld [vmem:[%s979 + $0xe0] sm:$0xff]
        %v1009 = vld [vmem:[%s979 + $0xe8] sm:$0xff]
        %v1010 = vld [vmem:[%s979 + $0xf0] sm:$0xff]
        %v1011 = vld [vmem:[%s979 + $0xf8] sm:$0xff]
        %v1012 = vld [vmem:[%s979 + $0x100] sm:$0xff]
        %v1013 = vld [vmem:[%s979 + $0x108] sm:$0xff]
        %v1014 = vld [vmem:[%s979 + $0x110] sm:$0xff]
        %v1015 = vld [vmem:[%s979 + $0x118] sm:$0xff]
        %v1016 = vld [vmem:[%s979 + $0x120] sm:$0xff]
        %v1017 = vld [vmem:[%s979 + $0x128] sm:$0xff]
        %v1018 = vld [vmem:[%s979 + $0x130] sm:$0xff]
        %v1019 = vld [vmem:[%s979 + $0x138] sm:$0xff]
        %v1020 = vld [vmem:[%s979 + $0x140] sm:$0xff]
        %v1021 = vld [vmem:[%s979 + $0x148] sm:$0xff]
        %v1022 = vld [vmem:[%s979 + $0x150] sm:$0xff]
        %v1023 = vld [vmem:[%s979 + $0x158] sm:$0xff]
        %v1024 = vld [vmem:[%s979 + $0x160] sm:$0xff]
        %v1025 = vld [vmem:[%s979 + $0x168] sm:$0xff]
        %v1026 = vld [vmem:[%s979 + $0x170] sm:$0xff]
        %v1027 = vld [vmem:[%s979 + $0x178] sm:$0xff]
        %v1028 = vld [vmem:[%s979 + $0x180] sm:$0xff]
        %v1029 = vld [vmem:[%s979 + $0x188] sm:$0xff]
        %v1030 = vld [vmem:[%s979 + $0x190] sm:$0xff]
        %v1031 = vld [vmem:[%s979 + $0x198] sm:$0xff]
        %v1032 = vld [vmem:[%s979 + $0x1a0] sm:$0xff]
        %v1033 = vld [vmem:[%s979 + $0x1a8] sm:$0xff]
        %v1034 = vld [vmem:[%s979 + $0x1b0] sm:$0xff]
        %v1035 = vld [vmem:[%s979 + $0x1b8] sm:$0xff]
        %v1036 = vld [vmem:[%s979 + $0x1c0] sm:$0xff]
        %v1037 = vld [vmem:[%s979 + $0x1c8] sm:$0xff]
        %v1038 = vld [vmem:[%s979 + $0x1d0] sm:$0xff]
        %v1039 = vld [vmem:[%s979 + $0x1d8] sm:$0xff]
        %v1040 = vld [vmem:[%s979 + $0x1e0] sm:$0xff]
        %v1041 = vld [vmem:[%s979 + $0x1e8] sm:$0xff]
        %v1042 = vld [vmem:[%s979 + $0x1f0] sm:$0xff]
        %v1043 = vld [vmem:[%s979 + $0x1f8] sm:$0xff]
        %v1044 = vld [vmem:[%s979 + $0x200] sm:$0xff]
        %v1045 = vld [vmem:[%s979 + $0x208] sm:$0xff]
        %v1046 = vld [vmem:[%s979 + $0x210] sm:$0xff]
        %v1047 = vld [vmem:[%s979 + $0x218] sm:$0xff]
        %v1048 = vld [vmem:[%s979 + $0x220] sm:$0xff]
        %v1049 = vld [vmem:[%s979 + $0x228] sm:$0xff]
        %v1050 = vld [vmem:[%s979 + $0x230] sm:$0xff]
        %v1051 = vld [vmem:[%s979 + $0x238] sm:$0xff]
        %v1052 = vld [vmem:[%s979 + $0x240] sm:$0xff]
        %v1053 = vld [vmem:[%s979 + $0x248] sm:$0xff]
        %v1054 = vld [vmem:[%s979 + $0x250] sm:$0xff]
        %v1055 = vld [vmem:[%s979 + $0x258] sm:$0xff]
        %v1056 = vld [vmem:[%s979 + $0x260] sm:$0xff]
        %v1057 = vld [vmem:[%s979 + $0x268] sm:$0xff]
        %v1058 = vmax.f32 %v901, %v980
        %v1059 = vmax.f32 %v902, %v981
        %v1060 = vmax.f32 %v903, %v982
        %v1061 = vmax.f32 %v904, %v983
        %v1062 = vmax.f32 %v905, %v984
        %v1063 = vmax.f32 %v906, %v985
        %v1064 = vmax.f32 %v907, %v986
        %v1065 = vmax.f32 %v908, %v987
        %v1066 = vmax.f32 %v909, %v988
        %v1067 = vmax.f32 %v910, %v989
        %v1068 = vmax.f32 %v911, %v990
        %v1069 = vmax.f32 %v912, %v991
        %v1070 = vmax.f32 %v913, %v992
        %v1071 = vmax.f32 %v914, %v993
        %v1072 = vmax.f32 %v915, %v994
        %v1073 = vmax.f32 %v916, %v995
        %v1074 = vmax.f32 %v917, %v996
        %v1075 = vmax.f32 %v918, %v997
        %v1076 = vmax.f32 %v919, %v998
        %v1077 = vmax.f32 %v920, %v999
        %v1078 = vmax.f32 %v921, %v1000
        %v1079 = vmax.f32 %v922, %v1001
        %v1080 = vmax.f32 %v923, %v1002
        %v1081 = vmax.f32 %v924, %v1003
        %v1082 = vmax.f32 %v925, %v1004
        %v1083 = vmax.f32 %v926, %v1005
        %v1084 = vmax.f32 %v927, %v1006
        %v1085 = vmax.f32 %v928, %v1007
        %v1086 = vmax.f32 %v929, %v1008
        %v1087 = vmax.f32 %v930, %v1009
        %v1088 = vmax.f32 %v931, %v1010
        %v1089 = vmax.f32 %v932, %v1011
        %v1090 = vmax.f32 %v933, %v1012
        %v1091 = vmax.f32 %v934, %v1013
        %v1092 = vmax.f32 %v935, %v1014
        %v1093 = vmax.f32 %v936, %v1015
        %v1094 = vmax.f32 %v937, %v1016
        %v1095 = vmax.f32 %v938, %v1017
        %v1096 = vmax.f32 %v939, %v1018
        %v1097 = vmax.f32 %v940, %v1019
        %v1098 = vmax.f32 %v941, %v1020
        %v1099 = vmax.f32 %v942, %v1021
        %v1100 = vmax.f32 %v943, %v1022
        %v1101 = vmax.f32 %v944, %v1023
        %v1102 = vmax.f32 %v945, %v1024
        %v1103 = vmax.f32 %v946, %v1025
        %v1104 = vmax.f32 %v947, %v1026
        %v1105 = vmax.f32 %v948, %v1027
        %v1106 = vmax.f32 %v949, %v1028
        %v1107 = vmax.f32 %v950, %v1029
        %v1108 = vmax.f32 %v951, %v1030
        %v1109 = vmax.f32 %v952, %v1031
        %v1110 = vmax.f32 %v953, %v1032
        %v1111 = vmax.f32 %v954, %v1033
        %v1112 = vmax.f32 %v955, %v1034
        %v1113 = vmax.f32 %v956, %v1035
        %v1114 = vmax.f32 %v957, %v1036
        %v1115 = vmax.f32 %v958, %v1037
        %v1116 = vmax.f32 %v959, %v1038
        %v1117 = vmax.f32 %v960, %v1039
        %v1118 = vmax.f32 %v961, %v1040
        %v1119 = vmax.f32 %v962, %v1041
        %v1120 = vmax.f32 %v963, %v1042
        %v1121 = vmax.f32 %v964, %v1043
        %v1122 = vmax.f32 %v965, %v1044
        %v1123 = vmax.f32 %v966, %v1045
        %v1124 = vmax.f32 %v967, %v1046
        %v1125 = vmax.f32 %v968, %v1047
        %v1126 = vmax.f32 %v969, %v1048
        %v1127 = vmax.f32 %v970, %v1049
        %v1128 = vmax.f32 %v971, %v1050
        %v1129 = vmax.f32 %v972, %v1051
        %v1130 = vmax.f32 %v973, %v1052
        %v1131 = vmax.f32 %v974, %v1053
        %v1132 = vmax.f32 %v975, %v1054
        %v1133 = vmax.f32 %v976, %v1055
        %v1134 = vmax.f32 %v977, %v1056
        %v1135 = vmax.f32 %v978, %v1057
        %v1136 = vmax.f32 %v1058, %v1064
        %v1137 = vmax.f32 %v1059, %v1065
        %v1138 = vmax.f32 %v1060, %v1066
        %v1139 = vmax.f32 %v1061, %v1067
        %v1140 = vmax.f32 %v1062, %v1068
        %v1141 = vmax.f32 %v1063, %v1069
        %v1142 = vmax.f32 %v1064, %v1070
        %v1143 = vmax.f32 %v1065, %v1071
        %v1144 = vmax.f32 %v1066, %v1072
        %v1145 = vmax.f32 %v1067, %v1073
        %v1146 = vmax.f32 %v1068, %v1074
        %v1147 = vmax.f32 %v1069, %v1075
        %v1148 = vmax.f32 %v1070, %v1076
        %v1149 = vmax.f32 %v1071, %v1077
        %v1150 = vmax.f32 %v1072, %v1078
        %v1151 = vmax.f32 %v1073, %v1079
        %v1152 = vmax.f32 %v1074, %v1080
        %v1153 = vmax.f32 %v1075, %v1081
        %v1154 = vmax.f32 %v1076, %v1082
        %v1155 = vmax.f32 %v1077, %v1083
        %v1156 = vmax.f32 %v1078, %v1084
        %v1157 = vmax.f32 %v1079, %v1085
        %v1158 = vmax.f32 %v1080, %v1086
        %v1159 = vmax.f32 %v1081, %v1087
        %v1160 = vmax.f32 %v1082, %v1088
        %v1161 = vmax.f32 %v1083, %v1089
        %v1162 = vmax.f32 %v1084, %v1090
        %v1163 = vmax.f32 %v1085, %v1091
        %v1164 = vmax.f32 %v1086, %v1092
        %v1165 = vmax.f32 %v1087, %v1093
        %v1166 = vmax.f32 %v1088, %v1094
        %v1167 = vmax.f32 %v1089, %v1095
        %v1168 = vmax.f32 %v1090, %v1096
        %v1169 = vmax.f32 %v1091, %v1097
        %v1170 = vmax.f32 %v1092, %v1098
        %v1171 = vmax.f32 %v1093, %v1099
        %v1172 = vmax.f32 %v1094, %v1100
        %v1173 = vmax.f32 %v1095, %v1101
        %v1174 = vmax.f32 %v1096, %v1102
        %v1175 = vmax.f32 %v1097, %v1103
        %v1176 = vmax.f32 %v1098, %v1104
        %v1177 = vmax.f32 %v1099, %v1105
        %v1178 = vmax.f32 %v1100, %v1106
        %v1179 = vmax.f32 %v1101, %v1107
        %v1180 = vmax.f32 %v1102, %v1108
        %v1181 = vmax.f32 %v1103, %v1109
        %v1182 = vmax.f32 %v1104, %v1110
        %v1183 = vmax.f32 %v1105, %v1111
        %v1184 = vmax.f32 %v1106, %v1112
        %v1185 = vmax.f32 %v1107, %v1113
        %v1186 = vmax.f32 %v1108, %v1114
        %v1187 = vmax.f32 %v1109, %v1115
        %v1188 = vmax.f32 %v1110, %v1116
        %v1189 = vmax.f32 %v1111, %v1117
        %v1190 = vmax.f32 %v1112, %v1118
        %v1191 = vmax.f32 %v1113, %v1119
        %v1192 = vmax.f32 %v1114, %v1120
        %v1193 = vmax.f32 %v1115, %v1121
        %v1194 = vmax.f32 %v1116, %v1122
        %v1195 = vmax.f32 %v1117, %v1123
        %v1196 = vmax.f32 %v1118, %v1124
        %v1197 = vmax.f32 %v1119, %v1125
        %v1198 = vmax.f32 %v1120, %v1126
        %v1199 = vmax.f32 %v1121, %v1127
        %v1200 = vmax.f32 %v1122, %v1128
        %v1201 = vmax.f32 %v1123, %v1129
        %v1202 = vmax.f32 %v1124, %v1130
        %v1203 = vmax.f32 %v1125, %v1131
        %v1204 = vmax.f32 %v1126, %v1132
        %v1205 = vmax.f32 %v1127, %v1133
        %v1206 = vmax.f32 %v1128, %v1134
        %v1207 = vmax.f32 %v1129, %v1135
        %s1208 = scalar_lea.vmem [#allocation3], 96
        %v1209 = vld [vmem:[%s1208] sm:$0xff]
        %v1210 = vld [vmem:[%s1208 + $0x8] sm:$0xff]
        %v1211 = vld [vmem:[%s1208 + $0x10] sm:$0xff]
        %v1212 = vld [vmem:[%s1208 + $0x18] sm:$0xff]
        %v1213 = vld [vmem:[%s1208 + $0x20] sm:$0xff]
        %v1214 = vld [vmem:[%s1208 + $0x28] sm:$0xff]
        %v1215 = vld [vmem:[%s1208 + $0x30] sm:$0xff]
        %v1216 = vld [vmem:[%s1208 + $0x38] sm:$0xff]
        %v1217 = vld [vmem:[%s1208 + $0x40] sm:$0xff]
        %v1218 = vld [vmem:[%s1208 + $0x48] sm:$0xff]
        %v1219 = vld [vmem:[%s1208 + $0x50] sm:$0xff]
        %v1220 = vld [vmem:[%s1208 + $0x58] sm:$0xff]
        %v1221 = vld [vmem:[%s1208 + $0x60] sm:$0xff]
        %v1222 = vld [vmem:[%s1208 + $0x68] sm:$0xff]
        %v1223 = vld [vmem:[%s1208 + $0x70] sm:$0xff]
        %v1224 = vld [vmem:[%s1208 + $0x78] sm:$0xff]
        %v1225 = vld [vmem:[%s1208 + $0x80] sm:$0xff]
        %v1226 = vld [vmem:[%s1208 + $0x88] sm:$0xff]
        %v1227 = vld [vmem:[%s1208 + $0x90] sm:$0xff]
        %v1228 = vld [vmem:[%s1208 + $0x98] sm:$0xff]
        %v1229 = vld [vmem:[%s1208 + $0xa0] sm:$0xff]
        %v1230 = vld [vmem:[%s1208 + $0xa8] sm:$0xff]
        %v1231 = vld [vmem:[%s1208 + $0xb0] sm:$0xff]
        %v1232 = vld [vmem:[%s1208 + $0xb8] sm:$0xff]
        %v1233 = vld [vmem:[%s1208 + $0xc0] sm:$0xff]
        %v1234 = vld [vmem:[%s1208 + $0xc8] sm:$0xff]
        %v1235 = vld [vmem:[%s1208 + $0xd0] sm:$0xff]
        %v1236 = vld [vmem:[%s1208 + $0xd8] sm:$0xff]
        %v1237 = vld [vmem:[%s1208 + $0xe0] sm:$0xff]
        %v1238 = vld [vmem:[%s1208 + $0xe8] sm:$0xff]
        %v1239 = vld [vmem:[%s1208 + $0xf0] sm:$0xff]
        %v1240 = vld [vmem:[%s1208 + $0xf8] sm:$0xff]
        %v1241 = vld [vmem:[%s1208 + $0x100] sm:$0xff]
        %v1242 = vld [vmem:[%s1208 + $0x108] sm:$0xff]
        %v1243 = vld [vmem:[%s1208 + $0x110] sm:$0xff]
        %v1244 = vld [vmem:[%s1208 + $0x118] sm:$0xff]
        %v1245 = vld [vmem:[%s1208 + $0x120] sm:$0xff]
        %v1246 = vld [vmem:[%s1208 + $0x128] sm:$0xff]
        %v1247 = vld [vmem:[%s1208 + $0x130] sm:$0xff]
        %v1248 = vld [vmem:[%s1208 + $0x138] sm:$0xff]
        %v1249 = vld [vmem:[%s1208 + $0x140] sm:$0xff]
        %v1250 = vld [vmem:[%s1208 + $0x148] sm:$0xff]
        %v1251 = vld [vmem:[%s1208 + $0x150] sm:$0xff]
        %v1252 = vld [vmem:[%s1208 + $0x158] sm:$0xff]
        %v1253 = vld [vmem:[%s1208 + $0x160] sm:$0xff]
        %v1254 = vld [vmem:[%s1208 + $0x168] sm:$0xff]
        %v1255 = vld [vmem:[%s1208 + $0x170] sm:$0xff]
        %v1256 = vld [vmem:[%s1208 + $0x178] sm:$0xff]
        %v1257 = vld [vmem:[%s1208 + $0x180] sm:$0xff]
        %v1258 = vld [vmem:[%s1208 + $0x188] sm:$0xff]
        %v1259 = vld [vmem:[%s1208 + $0x190] sm:$0xff]
        %v1260 = vld [vmem:[%s1208 + $0x198] sm:$0xff]
        %v1261 = vld [vmem:[%s1208 + $0x1a0] sm:$0xff]
        %v1262 = vld [vmem:[%s1208 + $0x1a8] sm:$0xff]
        %v1263 = vld [vmem:[%s1208 + $0x1b0] sm:$0xff]
        %v1264 = vld [vmem:[%s1208 + $0x1b8] sm:$0xff]
        %v1265 = vld [vmem:[%s1208 + $0x1c0] sm:$0xff]
        %v1266 = vld [vmem:[%s1208 + $0x1c8] sm:$0xff]
        %v1267 = vld [vmem:[%s1208 + $0x1d0] sm:$0xff]
        %v1268 = vld [vmem:[%s1208 + $0x1d8] sm:$0xff]
        %v1269 = vld [vmem:[%s1208 + $0x1e0] sm:$0xff]
        %v1270 = vld [vmem:[%s1208 + $0x1e8] sm:$0xff]
        %v1271 = vld [vmem:[%s1208 + $0x1f0] sm:$0xff]
        %v1272 = vld [vmem:[%s1208 + $0x1f8] sm:$0xff]
        %v1273 = vld [vmem:[%s1208 + $0x200] sm:$0xff]
        %v1274 = vld [vmem:[%s1208 + $0x208] sm:$0xff]
        %v1275 = vld [vmem:[%s1208 + $0x210] sm:$0xff]
        %v1276 = vld [vmem:[%s1208 + $0x218] sm:$0xff]
        %v1277 = vld [vmem:[%s1208 + $0x220] sm:$0xff]
        %v1278 = vld [vmem:[%s1208 + $0x228] sm:$0xff]
        %v1279 = vld [vmem:[%s1208 + $0x230] sm:$0xff]
        %v1280 = vld [vmem:[%s1208 + $0x238] sm:$0xff]
        %v1281 = vmax.f32 %v1136, %v1209
        %v1282 = vmax.f32 %v1137, %v1210
        %v1283 = vmax.f32 %v1138, %v1211
        %v1284 = vmax.f32 %v1139, %v1212
        %v1285 = vmax.f32 %v1140, %v1213
        %v1286 = vmax.f32 %v1141, %v1214
        %v1287 = vmax.f32 %v1142, %v1215
        %v1288 = vmax.f32 %v1143, %v1216
        %v1289 = vmax.f32 %v1144, %v1217
        %v1290 = vmax.f32 %v1145, %v1218
        %v1291 = vmax.f32 %v1146, %v1219
        %v1292 = vmax.f32 %v1147, %v1220
        %v1293 = vmax.f32 %v1148, %v1221
        %v1294 = vmax.f32 %v1149, %v1222
        %v1295 = vmax.f32 %v1150, %v1223
        %v1296 = vmax.f32 %v1151, %v1224
        %v1297 = vmax.f32 %v1152, %v1225
        %v1298 = vmax.f32 %v1153, %v1226
        %v1299 = vmax.f32 %v1154, %v1227
        %v1300 = vmax.f32 %v1155, %v1228
        %v1301 = vmax.f32 %v1156, %v1229
        %v1302 = vmax.f32 %v1157, %v1230
        %v1303 = vmax.f32 %v1158, %v1231
        %v1304 = vmax.f32 %v1159, %v1232
        %v1305 = vmax.f32 %v1160, %v1233
        %v1306 = vmax.f32 %v1161, %v1234
        %v1307 = vmax.f32 %v1162, %v1235
        %v1308 = vmax.f32 %v1163, %v1236
        %v1309 = vmax.f32 %v1164, %v1237
        %v1310 = vmax.f32 %v1165, %v1238
        %v1311 = vmax.f32 %v1166, %v1239
        %v1312 = vmax.f32 %v1167, %v1240
        %v1313 = vmax.f32 %v1168, %v1241
        %v1314 = vmax.f32 %v1169, %v1242
        %v1315 = vmax.f32 %v1170, %v1243
        %v1316 = vmax.f32 %v1171, %v1244
        %v1317 = vmax.f32 %v1172, %v1245
        %v1318 = vmax.f32 %v1173, %v1246
        %v1319 = vmax.f32 %v1174, %v1247
        %v1320 = vmax.f32 %v1175, %v1248
        %v1321 = vmax.f32 %v1176, %v1249
        %v1322 = vmax.f32 %v1177, %v1250
        %v1323 = vmax.f32 %v1178, %v1251
        %v1324 = vmax.f32 %v1179, %v1252
        %v1325 = vmax.f32 %v1180, %v1253
        %v1326 = vmax.f32 %v1181, %v1254
        %v1327 = vmax.f32 %v1182, %v1255
        %v1328 = vmax.f32 %v1183, %v1256
        %v1329 = vmax.f32 %v1184, %v1257
        %v1330 = vmax.f32 %v1185, %v1258
        %v1331 = vmax.f32 %v1186, %v1259
        %v1332 = vmax.f32 %v1187, %v1260
        %v1333 = vmax.f32 %v1188, %v1261
        %v1334 = vmax.f32 %v1189, %v1262
        %v1335 = vmax.f32 %v1190, %v1263
        %v1336 = vmax.f32 %v1191, %v1264
        %v1337 = vmax.f32 %v1192, %v1265
        %v1338 = vmax.f32 %v1193, %v1266
        %v1339 = vmax.f32 %v1194, %v1267
        %v1340 = vmax.f32 %v1195, %v1268
        %v1341 = vmax.f32 %v1196, %v1269
        %v1342 = vmax.f32 %v1197, %v1270
        %v1343 = vmax.f32 %v1198, %v1271
        %v1344 = vmax.f32 %v1199, %v1272
        %v1345 = vmax.f32 %v1200, %v1273
        %v1346 = vmax.f32 %v1201, %v1274
        %v1347 = vmax.f32 %v1202, %v1275
        %v1348 = vmax.f32 %v1203, %v1276
        %v1349 = vmax.f32 %v1204, %v1277
        %v1350 = vmax.f32 %v1205, %v1278
        %v1351 = vmax.f32 %v1206, %v1279
        %v1352 = vmax.f32 %v1207, %v1280
        %1353 = vst [vmem:[#allocation4] sm:$0xff] %v1281
        %1354 = vst [vmem:[#allocation4 + $0x8] sm:$0xff] %v1282
        %1355 = vst [vmem:[#allocation4 + $0x10] sm:$0xff] %v1283
        %1356 = vst [vmem:[#allocation4 + $0x18] sm:$0xff] %v1284
        %1357 = vst [vmem:[#allocation4 + $0x20] sm:$0xff] %v1285
        %1358 = vst [vmem:[#allocation4 + $0x28] sm:$0xff] %v1286
        %1359 = vst [vmem:[#allocation4 + $0x30] sm:$0xff] %v1287
        %1360 = vst [vmem:[#allocation4 + $0x38] sm:$0xff] %v1288
        %1361 = vst [vmem:[#allocation4 + $0x40] sm:$0xff] %v1289
        %1362 = vst [vmem:[#allocation4 + $0x48] sm:$0xff] %v1290
        %1363 = vst [vmem:[#allocation4 + $0x50] sm:$0xff] %v1291
        %1364 = vst [vmem:[#allocation4 + $0x58] sm:$0xff] %v1292
        %1365 = vst [vmem:[#allocation4 + $0x60] sm:$0xff] %v1293
        %1366 = vst [vmem:[#allocation4 + $0x68] sm:$0xff] %v1294
        %1367 = vst [vmem:[#allocation4 + $0x70] sm:$0xff] %v1295
        %1368 = vst [vmem:[#allocation4 + $0x78] sm:$0xff] %v1296
        %1369 = vst [vmem:[#allocation4 + $0x80] sm:$0xff] %v1297
        %1370 = vst [vmem:[#allocation4 + $0x88] sm:$0xff] %v1298
        %1371 = vst [vmem:[#allocation4 + $0x90] sm:$0xff] %v1299
        %1372 = vst [vmem:[#allocation4 + $0x98] sm:$0xff] %v1300
        %1373 = vst [vmem:[#allocation4 + $0xa0] sm:$0xff] %v1301
        %1374 = vst [vmem:[#allocation4 + $0xa8] sm:$0xff] %v1302
        %1375 = vst [vmem:[#allocation4 + $0xb0] sm:$0xff] %v1303
        %1376 = vst [vmem:[#allocation4 + $0xb8] sm:$0xff] %v1304
        %1377 = vst [vmem:[#allocation4 + $0xc0] sm:$0xff] %v1305
        %1378 = vst [vmem:[#allocation4 + $0xc8] sm:$0xff] %v1306
        %1379 = vst [vmem:[#allocation4 + $0xd0] sm:$0xff] %v1307
        %1380 = vst [vmem:[#allocation4 + $0xd8] sm:$0xff] %v1308
        %1381 = vst [vmem:[#allocation4 + $0xe0] sm:$0xff] %v1309
        %1382 = vst [vmem:[#allocation4 + $0xe8] sm:$0xff] %v1310
        %1383 = vst [vmem:[#allocation4 + $0xf0] sm:$0xff] %v1311
        %1384 = vst [vmem:[#allocation4 + $0xf8] sm:$0xff] %v1312
        %1385 = vst [vmem:[#allocation4 + $0x100] sm:$0xff] %v1313
        %1386 = vst [vmem:[#allocation4 + $0x108] sm:$0xff] %v1314
        %1387 = vst [vmem:[#allocation4 + $0x110] sm:$0xff] %v1315
        %1388 = vst [vmem:[#allocation4 + $0x118] sm:$0xff] %v1316
        %1389 = vst [vmem:[#allocation4 + $0x120] sm:$0xff] %v1317
        %1390 = vst [vmem:[#allocation4 + $0x128] sm:$0xff] %v1318
        %1391 = vst [vmem:[#allocation4 + $0x130] sm:$0xff] %v1319
        %1392 = vst [vmem:[#allocation4 + $0x138] sm:$0xff] %v1320
        %1393 = vst [vmem:[#allocation4 + $0x140] sm:$0xff] %v1321
        %1394 = vst [vmem:[#allocation4 + $0x148] sm:$0xff] %v1322
        %1395 = vst [vmem:[#allocation4 + $0x150] sm:$0xff] %v1323
        %1396 = vst [vmem:[#allocation4 + $0x158] sm:$0xff] %v1324
        %1397 = vst [vmem:[#allocation4 + $0x160] sm:$0xff] %v1325
        %1398 = vst [vmem:[#allocation4 + $0x168] sm:$0xff] %v1326
        %1399 = vst [vmem:[#allocation4 + $0x170] sm:$0xff] %v1327
        %1400 = vst [vmem:[#allocation4 + $0x178] sm:$0xff] %v1328
        %1401 = vst [vmem:[#allocation4 + $0x180] sm:$0xff] %v1329
        %1402 = vst [vmem:[#allocation4 + $0x188] sm:$0xff] %v1330
        %1403 = vst [vmem:[#allocation4 + $0x190] sm:$0xff] %v1331
        %1404 = vst [vmem:[#allocation4 + $0x198] sm:$0xff] %v1332
        %1405 = vst [vmem:[#allocation4 + $0x1a0] sm:$0xff] %v1333
        %1406 = vst [vmem:[#allocation4 + $0x1a8] sm:$0xff] %v1334
        %1407 = vst [vmem:[#allocation4 + $0x1b0] sm:$0xff] %v1335
        %1408 = vst [vmem:[#allocation4 + $0x1b8] sm:$0xff] %v1336
        %1409 = vst [vmem:[#allocation4 + $0x1c0] sm:$0xff] %v1337
        %1410 = vst [vmem:[#allocation4 + $0x1c8] sm:$0xff] %v1338
        %1411 = vst [vmem:[#allocation4 + $0x1d0] sm:$0xff] %v1339
        %1412 = vst [vmem:[#allocation4 + $0x1d8] sm:$0xff] %v1340
        %1413 = vst [vmem:[#allocation4 + $0x1e0] sm:$0xff] %v1341
        %1414 = vst [vmem:[#allocation4 + $0x1e8] sm:$0xff] %v1342
        %1415 = vst [vmem:[#allocation4 + $0x1f0] sm:$0xff] %v1343
        %1416 = vst [vmem:[#allocation4 + $0x1f8] sm:$0xff] %v1344
        %1417 = vst [vmem:[#allocation4 + $0x200] sm:$0xff] %v1345
        %1418 = vst [vmem:[#allocation4 + $0x208] sm:$0xff] %v1346
        %1419 = vst [vmem:[#allocation4 + $0x210] sm:$0xff] %v1347
        %1420 = vst [vmem:[#allocation4 + $0x218] sm:$0xff] %v1348
        %1421 = vst [vmem:[#allocation4 + $0x220] sm:$0xff] %v1349
        %1422 = vst [vmem:[#allocation4 + $0x228] sm:$0xff] %v1350
        %1423 = vst [vmem:[#allocation4 + $0x230] sm:$0xff] %v1351
        %1424 = vst [vmem:[#allocation4 + $0x238] sm:$0xff] %v1352
        %s1425 = scalar_lea.vmem [#allocation4], 96
        %v1426 = vld [vmem:[%s1425 + $0x4] sm:$0xff]
        %v1427 = vld [vmem:[%s1425 + $0xc] sm:$0xff]
        %v1428 = vld [vmem:[%s1425 + $0x1c] sm:$0xff]
        %v1429 = vld [vmem:[%s1425 + $0x24] sm:$0xff]
        %v1430 = vld [vmem:[%s1425 + $0x34] sm:$0xff]
        %v1431 = vld [vmem:[%s1425 + $0x3c] sm:$0xff]
        %v1432 = vld [vmem:[%s1425 + $0x4c] sm:$0xff]
        %v1433 = vld [vmem:[%s1425 + $0x54] sm:$0xff]
        %v1434 = vld [vmem:[%s1425 + $0x64] sm:$0xff]
        %v1435 = vld [vmem:[%s1425 + $0x6c] sm:$0xff]
        %v1436 = vld [vmem:[%s1425 + $0x7c] sm:$0xff]
        %v1437 = vld [vmem:[%s1425 + $0x84] sm:$0xff]
        %v1438 = vld [vmem:[%s1425 + $0x94] sm:$0xff]
        %v1439 = vld [vmem:[%s1425 + $0x9c] sm:$0xff]
        %v1440 = vld [vmem:[%s1425 + $0xac] sm:$0xff]
        %v1441 = vld [vmem:[%s1425 + $0xb4] sm:$0xff]
        %v1442 = vld [vmem:[%s1425 + $0xc4] sm:$0xff]
        %v1443 = vld [vmem:[%s1425 + $0xcc] sm:$0xff]
        %v1444 = vld [vmem:[%s1425 + $0xdc] sm:$0xff]
        %v1445 = vld [vmem:[%s1425 + $0xe4] sm:$0xff]
        %v1446 = vld [vmem:[%s1425 + $0xf4] sm:$0xff]
        %v1447 = vld [vmem:[%s1425 + $0xfc] sm:$0xff]
        %v1448 = vld [vmem:[%s1425 + $0x10c] sm:$0xff]
        %v1449 = vld [vmem:[%s1425 + $0x114] sm:$0xff]
        %v1450 = vld [vmem:[%s1425 + $0x124] sm:$0xff]
        %v1451 = vld [vmem:[%s1425 + $0x12c] sm:$0xff]
        %v1452 = vld [vmem:[%s1425 + $0x13c] sm:$0xff]
        %v1453 = vld [vmem:[%s1425 + $0x144] sm:$0xff]
        %v1454 = vld [vmem:[%s1425 + $0x154] sm:$0xff]
        %v1455 = vld [vmem:[%s1425 + $0x15c] sm:$0xff]
        %v1456 = vld [vmem:[%s1425 + $0x16c] sm:$0xff]
        %v1457 = vld [vmem:[%s1425 + $0x174] sm:$0xff]
        %s1458 = scalar_lea.vmem %s153, 512 [#allocation8]
        %1459 = vst [vmem:[%s1458] sm:$0xff] %v1426
        %1460 = vst [vmem:[%s1458 + $0x8] sm:$0xff] %v1427
        %1461 = vst [vmem:[%s1458 + $0x10] sm:$0xff] %v1428
        %1462 = vst [vmem:[%s1458 + $0x18] sm:$0xff] %v1429
        %1463 = vst [vmem:[%s1458 + $0x20] sm:$0xff] %v1430
        %1464 = vst [vmem:[%s1458 + $0x28] sm:$0xff] %v1431
        %1465 = vst [vmem:[%s1458 + $0x30] sm:$0xff] %v1432
        %1466 = vst [vmem:[%s1458 + $0x38] sm:$0xff] %v1433
        %1467 = vst [vmem:[%s1458 + $0x40] sm:$0xff] %v1434
        %1468 = vst [vmem:[%s1458 + $0x48] sm:$0xff] %v1435
        %1469 = vst [vmem:[%s1458 + $0x50] sm:$0xff] %v1436
        %1470 = vst [vmem:[%s1458 + $0x58] sm:$0xff] %v1437
        %1471 = vst [vmem:[%s1458 + $0x60] sm:$0xff] %v1438
        %1472 = vst [vmem:[%s1458 + $0x68] sm:$0xff] %v1439
        %1473 = vst [vmem:[%s1458 + $0x70] sm:$0xff] %v1440
        %1474 = vst [vmem:[%s1458 + $0x78] sm:$0xff] %v1441
        %1475 = vst [vmem:[%s1458 + $0x80] sm:$0xff] %v1442
        %1476 = vst [vmem:[%s1458 + $0x88] sm:$0xff] %v1443
        %1477 = vst [vmem:[%s1458 + $0x90] sm:$0xff] %v1444
        %1478 = vst [vmem:[%s1458 + $0x98] sm:$0xff] %v1445
        %1479 = vst [vmem:[%s1458 + $0xa0] sm:$0xff] %v1446
        %1480 = vst [vmem:[%s1458 + $0xa8] sm:$0xff] %v1447
        %1481 = vst [vmem:[%s1458 + $0xb0] sm:$0xff] %v1448
        %1482 = vst [vmem:[%s1458 + $0xb8] sm:$0xff] %v1449
        %1483 = vst [vmem:[%s1458 + $0xc0] sm:$0xff] %v1450
        %1484 = vst [vmem:[%s1458 + $0xc8] sm:$0xff] %v1451
        %1485 = vst [vmem:[%s1458 + $0xd0] sm:$0xff] %v1452
        %1486 = vst [vmem:[%s1458 + $0xd8] sm:$0xff] %v1453
        %1487 = vst [vmem:[%s1458 + $0xe0] sm:$0xff] %v1454
        %1488 = vst [vmem:[%s1458 + $0xe8] sm:$0xff] %v1455
        %1489 = vst [vmem:[%s1458 + $0xf0] sm:$0xff] %v1456
        %1490 = vst [vmem:[%s1458 + $0xf8] sm:$0xff] %v1457
        %s1491 = scalar_lea.vmem [#allocation4], 48
        %v1492 = vld [vmem:[%s1491 + $0x2] sm:$0xff]
        %v1493 = vld [vmem:[%s1491 + $0xa] sm:$0xff]
        %v1494 = vld [vmem:[%s1491 + $0x1a] sm:$0xff]
        %v1495 = vld [vmem:[%s1491 + $0x22] sm:$0xff]
        %v1496 = vld [vmem:[%s1491 + $0x32] sm:$0xff]
        %v1497 = vld [vmem:[%s1491 + $0x3a] sm:$0xff]
        %v1498 = vld [vmem:[%s1491 + $0x4a] sm:$0xff]
        %v1499 = vld [vmem:[%s1491 + $0x52] sm:$0xff]
        %v1500 = vld [vmem:[%s1491 + $0x62] sm:$0xff]
        %v1501 = vld [vmem:[%s1491 + $0x6a] sm:$0xff]
        %v1502 = vld [vmem:[%s1491 + $0x7a] sm:$0xff]
        %v1503 = vld [vmem:[%s1491 + $0x82] sm:$0xff]
        %v1504 = vld [vmem:[%s1491 + $0x92] sm:$0xff]
        %v1505 = vld [vmem:[%s1491 + $0x9a] sm:$0xff]
        %v1506 = vld [vmem:[%s1491 + $0xaa] sm:$0xff]
        %v1507 = vld [vmem:[%s1491 + $0xb2] sm:$0xff]
        %v1508 = vld [vmem:[%s1491 + $0xc2] sm:$0xff]
        %v1509 = vld [vmem:[%s1491 + $0xca] sm:$0xff]
        %v1510 = vld [vmem:[%s1491 + $0xda] sm:$0xff]
        %v1511 = vld [vmem:[%s1491 + $0xe2] sm:$0xff]
        %v1512 = vld [vmem:[%s1491 + $0xf2] sm:$0xff]
        %v1513 = vld [vmem:[%s1491 + $0xfa] sm:$0xff]
        %v1514 = vld [vmem:[%s1491 + $0x10a] sm:$0xff]
        %v1515 = vld [vmem:[%s1491 + $0x112] sm:$0xff]
        %v1516 = vld [vmem:[%s1491 + $0x122] sm:$0xff]
        %v1517 = vld [vmem:[%s1491 + $0x12a] sm:$0xff]
        %v1518 = vld [vmem:[%s1491 + $0x13a] sm:$0xff]
        %v1519 = vld [vmem:[%s1491 + $0x142] sm:$0xff]
        %v1520 = vld [vmem:[%s1491 + $0x152] sm:$0xff]
        %v1521 = vld [vmem:[%s1491 + $0x15a] sm:$0xff]
        %v1522 = vld [vmem:[%s1491 + $0x16a] sm:$0xff]
        %v1523 = vld [vmem:[%s1491 + $0x172] sm:$0xff]
        %v1524 = vld [vmem:[%s1491 + $0x6] sm:$0xff]
        %v1525 = vld [vmem:[%s1491 + $0xe] sm:$0xff]
        %v1526 = vld [vmem:[%s1491 + $0x1e] sm:$0xff]
        %v1527 = vld [vmem:[%s1491 + $0x26] sm:$0xff]
        %v1528 = vld [vmem:[%s1491 + $0x36] sm:$0xff]
        %v1529 = vld [vmem:[%s1491 + $0x3e] sm:$0xff]
        %v1530 = vld [vmem:[%s1491 + $0x4e] sm:$0xff]
        %v1531 = vld [vmem:[%s1491 + $0x56] sm:$0xff]
        %v1532 = vld [vmem:[%s1491 + $0x66] sm:$0xff]
        %v1533 = vld [vmem:[%s1491 + $0x6e] sm:$0xff]
        %v1534 = vld [vmem:[%s1491 + $0x7e] sm:$0xff]
        %v1535 = vld [vmem:[%s1491 + $0x86] sm:$0xff]
        %v1536 = vld [vmem:[%s1491 + $0x96] sm:$0xff]
        %v1537 = vld [vmem:[%s1491 + $0x9e] sm:$0xff]
        %v1538 = vld [vmem:[%s1491 + $0xae] sm:$0xff]
        %v1539 = vld [vmem:[%s1491 + $0xb6] sm:$0xff]
        %v1540 = vld [vmem:[%s1491 + $0xc6] sm:$0xff]
        %v1541 = vld [vmem:[%s1491 + $0xce] sm:$0xff]
        %v1542 = vld [vmem:[%s1491 + $0xde] sm:$0xff]
        %v1543 = vld [vmem:[%s1491 + $0xe6] sm:$0xff]
        %v1544 = vld [vmem:[%s1491 + $0xf6] sm:$0xff]
        %v1545 = vld [vmem:[%s1491 + $0xfe] sm:$0xff]
        %v1546 = vld [vmem:[%s1491 + $0x10e] sm:$0xff]
        %v1547 = vld [vmem:[%s1491 + $0x116] sm:$0xff]
        %v1548 = vld [vmem:[%s1491 + $0x126] sm:$0xff]
        %v1549 = vld [vmem:[%s1491 + $0x12e] sm:$0xff]
        %v1550 = vld [vmem:[%s1491 + $0x13e] sm:$0xff]
        %v1551 = vld [vmem:[%s1491 + $0x146] sm:$0xff]
        %v1552 = vld [vmem:[%s1491 + $0x156] sm:$0xff]
        %v1553 = vld [vmem:[%s1491 + $0x15e] sm:$0xff]
        %v1554 = vld [vmem:[%s1491 + $0x16e] sm:$0xff]
        %v1555 = vld [vmem:[%s1491 + $0x176] sm:$0xff]
        %v1556 = vmax.f32 %v1492, %v1524
        %v1557 = vmax.f32 %v1493, %v1525
        %v1558 = vmax.f32 %v1494, %v1526
        %v1559 = vmax.f32 %v1495, %v1527
        %v1560 = vmax.f32 %v1496, %v1528
        %v1561 = vmax.f32 %v1497, %v1529
        %v1562 = vmax.f32 %v1498, %v1530
        %v1563 = vmax.f32 %v1499, %v1531
        %v1564 = vmax.f32 %v1500, %v1532
        %v1565 = vmax.f32 %v1501, %v1533
        %v1566 = vmax.f32 %v1502, %v1534
        %v1567 = vmax.f32 %v1503, %v1535
        %v1568 = vmax.f32 %v1504, %v1536
        %v1569 = vmax.f32 %v1505, %v1537
        %v1570 = vmax.f32 %v1506, %v1538
        %v1571 = vmax.f32 %v1507, %v1539
        %v1572 = vmax.f32 %v1508, %v1540
        %v1573 = vmax.f32 %v1509, %v1541
        %v1574 = vmax.f32 %v1510, %v1542
        %v1575 = vmax.f32 %v1511, %v1543
        %v1576 = vmax.f32 %v1512, %v1544
        %v1577 = vmax.f32 %v1513, %v1545
        %v1578 = vmax.f32 %v1514, %v1546
        %v1579 = vmax.f32 %v1515, %v1547
        %v1580 = vmax.f32 %v1516, %v1548
        %v1581 = vmax.f32 %v1517, %v1549
        %v1582 = vmax.f32 %v1518, %v1550
        %v1583 = vmax.f32 %v1519, %v1551
        %v1584 = vmax.f32 %v1520, %v1552
        %v1585 = vmax.f32 %v1521, %v1553
        %v1586 = vmax.f32 %v1522, %v1554
        %v1587 = vmax.f32 %v1523, %v1555
        %s1588 = scalar_lea.vmem [#allocation4], 144
        %v1589 = vld [vmem:[%s1588 + $0x2] sm:$0xff]
        %v1590 = vld [vmem:[%s1588 + $0xa] sm:$0xff]
        %v1591 = vld [vmem:[%s1588 + $0x1a] sm:$0xff]
        %v1592 = vld [vmem:[%s1588 + $0x22] sm:$0xff]
        %v1593 = vld [vmem:[%s1588 + $0x32] sm:$0xff]
        %v1594 = vld [vmem:[%s1588 + $0x3a] sm:$0xff]
        %v1595 = vld [vmem:[%s1588 + $0x4a] sm:$0xff]
        %v1596 = vld [vmem:[%s1588 + $0x52] sm:$0xff]
        %v1597 = vld [vmem:[%s1588 + $0x62] sm:$0xff]
        %v1598 = vld [vmem:[%s1588 + $0x6a] sm:$0xff]
        %v1599 = vld [vmem:[%s1588 + $0x7a] sm:$0xff]
        %v1600 = vld [vmem:[%s1588 + $0x82] sm:$0xff]
        %v1601 = vld [vmem:[%s1588 + $0x92] sm:$0xff]
        %v1602 = vld [vmem:[%s1588 + $0x9a] sm:$0xff]
        %v1603 = vld [vmem:[%s1588 + $0xaa] sm:$0xff]
        %v1604 = vld [vmem:[%s1588 + $0xb2] sm:$0xff]
        %v1605 = vld [vmem:[%s1588 + $0xc2] sm:$0xff]
        %v1606 = vld [vmem:[%s1588 + $0xca] sm:$0xff]
        %v1607 = vld [vmem:[%s1588 + $0xda] sm:$0xff]
        %v1608 = vld [vmem:[%s1588 + $0xe2] sm:$0xff]
        %v1609 = vld [vmem:[%s1588 + $0xf2] sm:$0xff]
        %v1610 = vld [vmem:[%s1588 + $0xfa] sm:$0xff]
        %v1611 = vld [vmem:[%s1588 + $0x10a] sm:$0xff]
        %v1612 = vld [vmem:[%s1588 + $0x112] sm:$0xff]
        %v1613 = vld [vmem:[%s1588 + $0x122] sm:$0xff]
        %v1614 = vld [vmem:[%s1588 + $0x12a] sm:$0xff]
        %v1615 = vld [vmem:[%s1588 + $0x13a] sm:$0xff]
        %v1616 = vld [vmem:[%s1588 + $0x142] sm:$0xff]
        %v1617 = vld [vmem:[%s1588 + $0x152] sm:$0xff]
        %v1618 = vld [vmem:[%s1588 + $0x15a] sm:$0xff]
        %v1619 = vld [vmem:[%s1588 + $0x16a] sm:$0xff]
        %v1620 = vld [vmem:[%s1588 + $0x172] sm:$0xff]
        %v1621 = vmax.f32 %v1556, %v1589
        %v1622 = vmax.f32 %v1557, %v1590
        %v1623 = vmax.f32 %v1558, %v1591
        %v1624 = vmax.f32 %v1559, %v1592
        %v1625 = vmax.f32 %v1560, %v1593
        %v1626 = vmax.f32 %v1561, %v1594
        %v1627 = vmax.f32 %v1562, %v1595
        %v1628 = vmax.f32 %v1563, %v1596
        %v1629 = vmax.f32 %v1564, %v1597
        %v1630 = vmax.f32 %v1565, %v1598
        %v1631 = vmax.f32 %v1566, %v1599
        %v1632 = vmax.f32 %v1567, %v1600
        %v1633 = vmax.f32 %v1568, %v1601
        %v1634 = vmax.f32 %v1569, %v1602
        %v1635 = vmax.f32 %v1570, %v1603
        %v1636 = vmax.f32 %v1571, %v1604
        %v1637 = vmax.f32 %v1572, %v1605
        %v1638 = vmax.f32 %v1573, %v1606
        %v1639 = vmax.f32 %v1574, %v1607
        %v1640 = vmax.f32 %v1575, %v1608
        %v1641 = vmax.f32 %v1576, %v1609
        %v1642 = vmax.f32 %v1577, %v1610
        %v1643 = vmax.f32 %v1578, %v1611
        %v1644 = vmax.f32 %v1579, %v1612
        %v1645 = vmax.f32 %v1580, %v1613
        %v1646 = vmax.f32 %v1581, %v1614
        %v1647 = vmax.f32 %v1582, %v1615
        %v1648 = vmax.f32 %v1583, %v1616
        %v1649 = vmax.f32 %v1584, %v1617
        %v1650 = vmax.f32 %v1585, %v1618
        %v1651 = vmax.f32 %v1586, %v1619
        %v1652 = vmax.f32 %v1587, %v1620
        %v1653 = vld [vmem:[%s1588 + $0x6] sm:$0xff]
        %v1654 = vld [vmem:[%s1588 + $0xe] sm:$0xff]
        %v1655 = vld [vmem:[%s1588 + $0x1e] sm:$0xff]
        %v1656 = vld [vmem:[%s1588 + $0x26] sm:$0xff]
        %v1657 = vld [vmem:[%s1588 + $0x36] sm:$0xff]
        %v1658 = vld [vmem:[%s1588 + $0x3e] sm:$0xff]
        %v1659 = vld [vmem:[%s1588 + $0x4e] sm:$0xff]
        %v1660 = vld [vmem:[%s1588 + $0x56] sm:$0xff]
        %v1661 = vld [vmem:[%s1588 + $0x66] sm:$0xff]
        %v1662 = vld [vmem:[%s1588 + $0x6e] sm:$0xff]
        %v1663 = vld [vmem:[%s1588 + $0x7e] sm:$0xff]
        %v1664 = vld [vmem:[%s1588 + $0x86] sm:$0xff]
        %v1665 = vld [vmem:[%s1588 + $0x96] sm:$0xff]
        %v1666 = vld [vmem:[%s1588 + $0x9e] sm:$0xff]
        %v1667 = vld [vmem:[%s1588 + $0xae] sm:$0xff]
        %v1668 = vld [vmem:[%s1588 + $0xb6] sm:$0xff]
        %v1669 = vld [vmem:[%s1588 + $0xc6] sm:$0xff]
        %v1670 = vld [vmem:[%s1588 + $0xce] sm:$0xff]
        %v1671 = vld [vmem:[%s1588 + $0xde] sm:$0xff]
        %v1672 = vld [vmem:[%s1588 + $0xe6] sm:$0xff]
        %v1673 = vld [vmem:[%s1588 + $0xf6] sm:$0xff]
        %v1674 = vld [vmem:[%s1588 + $0xfe] sm:$0xff]
        %v1675 = vld [vmem:[%s1588 + $0x10e] sm:$0xff]
        %v1676 = vld [vmem:[%s1588 + $0x116] sm:$0xff]
        %v1677 = vld [vmem:[%s1588 + $0x126] sm:$0xff]
        %v1678 = vld [vmem:[%s1588 + $0x12e] sm:$0xff]
        %v1679 = vld [vmem:[%s1588 + $0x13e] sm:$0xff]
        %v1680 = vld [vmem:[%s1588 + $0x146] sm:$0xff]
        %v1681 = vld [vmem:[%s1588 + $0x156] sm:$0xff]
        %v1682 = vld [vmem:[%s1588 + $0x15e] sm:$0xff]
        %v1683 = vld [vmem:[%s1588 + $0x16e] sm:$0xff]
        %v1684 = vld [vmem:[%s1588 + $0x176] sm:$0xff]
        %v1685 = vmax.f32 %v1621, %v1653
        %v1686 = vmax.f32 %v1622, %v1654
        %v1687 = vmax.f32 %v1623, %v1655
        %v1688 = vmax.f32 %v1624, %v1656
        %v1689 = vmax.f32 %v1625, %v1657
        %v1690 = vmax.f32 %v1626, %v1658
        %v1691 = vmax.f32 %v1627, %v1659
        %v1692 = vmax.f32 %v1628, %v1660
        %v1693 = vmax.f32 %v1629, %v1661
        %v1694 = vmax.f32 %v1630, %v1662
        %v1695 = vmax.f32 %v1631, %v1663
        %v1696 = vmax.f32 %v1632, %v1664
        %v1697 = vmax.f32 %v1633, %v1665
        %v1698 = vmax.f32 %v1634, %v1666
        %v1699 = vmax.f32 %v1635, %v1667
        %v1700 = vmax.f32 %v1636, %v1668
        %v1701 = vmax.f32 %v1637, %v1669
        %v1702 = vmax.f32 %v1638, %v1670
        %v1703 = vmax.f32 %v1639, %v1671
        %v1704 = vmax.f32 %v1640, %v1672
        %v1705 = vmax.f32 %v1641, %v1673
        %v1706 = vmax.f32 %v1642, %v1674
        %v1707 = vmax.f32 %v1643, %v1675
        %v1708 = vmax.f32 %v1644, %v1676
        %v1709 = vmax.f32 %v1645, %v1677
        %v1710 = vmax.f32 %v1646, %v1678
        %v1711 = vmax.f32 %v1647, %v1679
        %v1712 = vmax.f32 %v1648, %v1680
        %v1713 = vmax.f32 %v1649, %v1681
        %v1714 = vmax.f32 %v1650, %v1682
        %v1715 = vmax.f32 %v1651, %v1683
        %v1716 = vmax.f32 %v1652, %v1684
        %s1717 = scalar_lea.vmem %s153, 256 [#allocation8]
        %1718 = vst [vmem:[%s1717] sm:$0xff] %v1685
        %1719 = vst [vmem:[%s1717 + $0x8] sm:$0xff] %v1686
        %1720 = vst [vmem:[%s1717 + $0x10] sm:$0xff] %v1687
        %1721 = vst [vmem:[%s1717 + $0x18] sm:$0xff] %v1688
        %1722 = vst [vmem:[%s1717 + $0x20] sm:$0xff] %v1689
        %1723 = vst [vmem:[%s1717 + $0x28] sm:$0xff] %v1690
        %1724 = vst [vmem:[%s1717 + $0x30] sm:$0xff] %v1691
        %1725 = vst [vmem:[%s1717 + $0x38] sm:$0xff] %v1692
        %1726 = vst [vmem:[%s1717 + $0x40] sm:$0xff] %v1693
        %1727 = vst [vmem:[%s1717 + $0x48] sm:$0xff] %v1694
        %1728 = vst [vmem:[%s1717 + $0x50] sm:$0xff] %v1695
        %1729 = vst [vmem:[%s1717 + $0x58] sm:$0xff] %v1696
        %1730 = vst [vmem:[%s1717 + $0x60] sm:$0xff] %v1697
        %1731 = vst [vmem:[%s1717 + $0x68] sm:$0xff] %v1698
        %1732 = vst [vmem:[%s1717 + $0x70] sm:$0xff] %v1699
        %1733 = vst [vmem:[%s1717 + $0x78] sm:$0xff] %v1700
        %1734 = vst [vmem:[%s1717 + $0x80] sm:$0xff] %v1701
        %1735 = vst [vmem:[%s1717 + $0x88] sm:$0xff] %v1702
        %1736 = vst [vmem:[%s1717 + $0x90] sm:$0xff] %v1703
        %1737 = vst [vmem:[%s1717 + $0x98] sm:$0xff] %v1704
        %1738 = vst [vmem:[%s1717 + $0xa0] sm:$0xff] %v1705
        %1739 = vst [vmem:[%s1717 + $0xa8] sm:$0xff] %v1706
        %1740 = vst [vmem:[%s1717 + $0xb0] sm:$0xff] %v1707
        %1741 = vst [vmem:[%s1717 + $0xb8] sm:$0xff] %v1708
        %1742 = vst [vmem:[%s1717 + $0xc0] sm:$0xff] %v1709
        %1743 = vst [vmem:[%s1717 + $0xc8] sm:$0xff] %v1710
        %1744 = vst [vmem:[%s1717 + $0xd0] sm:$0xff] %v1711
        %1745 = vst [vmem:[%s1717 + $0xd8] sm:$0xff] %v1712
        %1746 = vst [vmem:[%s1717 + $0xe0] sm:$0xff] %v1713
        %1747 = vst [vmem:[%s1717 + $0xe8] sm:$0xff] %v1714
        %1748 = vst [vmem:[%s1717 + $0xf0] sm:$0xff] %v1715
        %1749 = vst [vmem:[%s1717 + $0xf8] sm:$0xff] %v1716
        %v1750 = vld [vmem:[#allocation4] sm:$0xff]
        %v1751 = vld [vmem:[#allocation4 + $0x8] sm:$0xff]
        %v1752 = vld [vmem:[#allocation4 + $0x18] sm:$0xff]
        %v1753 = vld [vmem:[#allocation4 + $0x20] sm:$0xff]
        %v1754 = vld [vmem:[#allocation4 + $0x30] sm:$0xff]
        %v1755 = vld [vmem:[#allocation4 + $0x38] sm:$0xff]
        %v1756 = vld [vmem:[#allocation4 + $0x48] sm:$0xff]
        %v1757 = vld [vmem:[#allocation4 + $0x50] sm:$0xff]
        %v1758 = vld [vmem:[#allocation4 + $0x60] sm:$0xff]
        %v1759 = vld [vmem:[#allocation4 + $0x68] sm:$0xff]
        %v1760 = vld [vmem:[#allocation4 + $0x78] sm:$0xff]
        %v1761 = vld [vmem:[#allocation4 + $0x80] sm:$0xff]
        %v1762 = vld [vmem:[#allocation4 + $0x90] sm:$0xff]
        %v1763 = vld [vmem:[#allocation4 + $0x98] sm:$0xff]
        %v1764 = vld [vmem:[#allocation4 + $0xa8] sm:$0xff]
        %v1765 = vld [vmem:[#allocation4 + $0xb0] sm:$0xff]
        %v1766 = vld [vmem:[#allocation4 + $0xc0] sm:$0xff]
        %v1767 = vld [vmem:[#allocation4 + $0xc8] sm:$0xff]
        %v1768 = vld [vmem:[#allocation4 + $0xd8] sm:$0xff]
        %v1769 = vld [vmem:[#allocation4 + $0xe0] sm:$0xff]
        %v1770 = vld [vmem:[#allocation4 + $0xf0] sm:$0xff]
        %v1771 = vld [vmem:[#allocation4 + $0xf8] sm:$0xff]
        %v1772 = vld [vmem:[#allocation4 + $0x108] sm:$0xff]
        %v1773 = vld [vmem:[#allocation4 + $0x110] sm:$0xff]
        %v1774 = vld [vmem:[#allocation4 + $0x120] sm:$0xff]
        %v1775 = vld [vmem:[#allocation4 + $0x128] sm:$0xff]
        %v1776 = vld [vmem:[#allocation4 + $0x138] sm:$0xff]
        %v1777 = vld [vmem:[#allocation4 + $0x140] sm:$0xff]
        %v1778 = vld [vmem:[#allocation4 + $0x150] sm:$0xff]
        %v1779 = vld [vmem:[#allocation4 + $0x158] sm:$0xff]
        %v1780 = vld [vmem:[#allocation4 + $0x168] sm:$0xff]
        %v1781 = vld [vmem:[#allocation4 + $0x170] sm:$0xff]
        %v1782 = vld [vmem:[#allocation4 + $0x4] sm:$0xff]
        %v1783 = vld [vmem:[#allocation4 + $0xc] sm:$0xff]
        %v1784 = vld [vmem:[#allocation4 + $0x1c] sm:$0xff]
        %v1785 = vld [vmem:[#allocation4 + $0x24] sm:$0xff]
        %v1786 = vld [vmem:[#allocation4 + $0x34] sm:$0xff]
        %v1787 = vld [vmem:[#allocation4 + $0x3c] sm:$0xff]
        %v1788 = vld [vmem:[#allocation4 + $0x4c] sm:$0xff]
        %v1789 = vld [vmem:[#allocation4 + $0x54] sm:$0xff]
        %v1790 = vld [vmem:[#allocation4 + $0x64] sm:$0xff]
        %v1791 = vld [vmem:[#allocation4 + $0x6c] sm:$0xff]
        %v1792 = vld [vmem:[#allocation4 + $0x7c] sm:$0xff]
        %v1793 = vld [vmem:[#allocation4 + $0x84] sm:$0xff]
        %v1794 = vld [vmem:[#allocation4 + $0x94] sm:$0xff]
        %v1795 = vld [vmem:[#allocation4 + $0x9c] sm:$0xff]
        %v1796 = vld [vmem:[#allocation4 + $0xac] sm:$0xff]
        %v1797 = vld [vmem:[#allocation4 + $0xb4] sm:$0xff]
        %v1798 = vld [vmem:[#allocation4 + $0xc4] sm:$0xff]
        %v1799 = vld [vmem:[#allocation4 + $0xcc] sm:$0xff]
        %v1800 = vld [vmem:[#allocation4 + $0xdc] sm:$0xff]
        %v1801 = vld [vmem:[#allocation4 + $0xe4] sm:$0xff]
        %v1802 = vld [vmem:[#allocation4 + $0xf4] sm:$0xff]
        %v1803 = vld [vmem:[#allocation4 + $0xfc] sm:$0xff]
        %v1804 = vld [vmem:[#allocation4 + $0x10c] sm:$0xff]
        %v1805 = vld [vmem:[#allocation4 + $0x114] sm:$0xff]
        %v1806 = vld [vmem:[#allocation4 + $0x124] sm:$0xff]
        %v1807 = vld [vmem:[#allocation4 + $0x12c] sm:$0xff]
        %v1808 = vld [vmem:[#allocation4 + $0x13c] sm:$0xff]
        %v1809 = vld [vmem:[#allocation4 + $0x144] sm:$0xff]
        %v1810 = vld [vmem:[#allocation4 + $0x154] sm:$0xff]
        %v1811 = vld [vmem:[#allocation4 + $0x15c] sm:$0xff]
        %v1812 = vld [vmem:[#allocation4 + $0x16c] sm:$0xff]
        %v1813 = vld [vmem:[#allocation4 + $0x174] sm:$0xff]
        %v1814 = vmax.f32 %v1750, %v1782
        %v1815 = vmax.f32 %v1751, %v1783
        %v1816 = vmax.f32 %v1752, %v1784
        %v1817 = vmax.f32 %v1753, %v1785
        %v1818 = vmax.f32 %v1754, %v1786
        %v1819 = vmax.f32 %v1755, %v1787
        %v1820 = vmax.f32 %v1756, %v1788
        %v1821 = vmax.f32 %v1757, %v1789
        %v1822 = vmax.f32 %v1758, %v1790
        %v1823 = vmax.f32 %v1759, %v1791
        %v1824 = vmax.f32 %v1760, %v1792
        %v1825 = vmax.f32 %v1761, %v1793
        %v1826 = vmax.f32 %v1762, %v1794
        %v1827 = vmax.f32 %v1763, %v1795
        %v1828 = vmax.f32 %v1764, %v1796
        %v1829 = vmax.f32 %v1765, %v1797
        %v1830 = vmax.f32 %v1766, %v1798
        %v1831 = vmax.f32 %v1767, %v1799
        %v1832 = vmax.f32 %v1768, %v1800
        %v1833 = vmax.f32 %v1769, %v1801
        %v1834 = vmax.f32 %v1770, %v1802
        %v1835 = vmax.f32 %v1771, %v1803
        %v1836 = vmax.f32 %v1772, %v1804
        %v1837 = vmax.f32 %v1773, %v1805
        %v1838 = vmax.f32 %v1774, %v1806
        %v1839 = vmax.f32 %v1775, %v1807
        %v1840 = vmax.f32 %v1776, %v1808
        %v1841 = vmax.f32 %v1777, %v1809
        %v1842 = vmax.f32 %v1778, %v1810
        %v1843 = vmax.f32 %v1779, %v1811
        %v1844 = vmax.f32 %v1780, %v1812
        %v1845 = vmax.f32 %v1781, %v1813
        %v1846 = vld [vmem:[#allocation4 + $0x10] sm:$0xff]
        %v1847 = vld [vmem:[#allocation4 + $0x28] sm:$0xff]
        %v1848 = vld [vmem:[#allocation4 + $0x40] sm:$0xff]
        %v1849 = vld [vmem:[#allocation4 + $0x58] sm:$0xff]
        %v1850 = vld [vmem:[#allocation4 + $0x70] sm:$0xff]
        %v1851 = vld [vmem:[#allocation4 + $0x88] sm:$0xff]
        %v1852 = vld [vmem:[#allocation4 + $0xa0] sm:$0xff]
        %v1853 = vld [vmem:[#allocation4 + $0xb8] sm:$0xff]
        %v1854 = vld [vmem:[#allocation4 + $0xd0] sm:$0xff]
        %v1855 = vld [vmem:[#allocation4 + $0xe8] sm:$0xff]
        %v1856 = vld [vmem:[#allocation4 + $0x100] sm:$0xff]
        %v1857 = vld [vmem:[#allocation4 + $0x118] sm:$0xff]
        %v1858 = vld [vmem:[#allocation4 + $0x130] sm:$0xff]
        %v1859 = vld [vmem:[#allocation4 + $0x148] sm:$0xff]
        %v1860 = vld [vmem:[#allocation4 + $0x160] sm:$0xff]
        %v1861 = vld [vmem:[#allocation4 + $0x178] sm:$0xff]
        %v1862 = vmax.f32 %v1814, %v1751
        %v1863 = vmax.f32 %v1815, %v1846
        %v1864 = vmax.f32 %v1816, %v1753
        %v1865 = vmax.f32 %v1817, %v1847
        %v1866 = vmax.f32 %v1818, %v1755
        %v1867 = vmax.f32 %v1819, %v1848
        %v1868 = vmax.f32 %v1820, %v1757
        %v1869 = vmax.f32 %v1821, %v1849
        %v1870 = vmax.f32 %v1822, %v1759
        %v1871 = vmax.f32 %v1823, %v1850
        %v1872 = vmax.f32 %v1824, %v1761
        %v1873 = vmax.f32 %v1825, %v1851
        %v1874 = vmax.f32 %v1826, %v1763
        %v1875 = vmax.f32 %v1827, %v1852
        %v1876 = vmax.f32 %v1828, %v1765
        %v1877 = vmax.f32 %v1829, %v1853
        %v1878 = vmax.f32 %v1830, %v1767
        %v1879 = vmax.f32 %v1831, %v1854
        %v1880 = vmax.f32 %v1832, %v1769
        %v1881 = vmax.f32 %v1833, %v1855
        %v1882 = vmax.f32 %v1834, %v1771
        %v1883 = vmax.f32 %v1835, %v1856
        %v1884 = vmax.f32 %v1836, %v1773
        %v1885 = vmax.f32 %v1837, %v1857
        %v1886 = vmax.f32 %v1838, %v1775
        %v1887 = vmax.f32 %v1839, %v1858
        %v1888 = vmax.f32 %v1840, %v1777
        %v1889 = vmax.f32 %v1841, %v1859
        %v1890 = vmax.f32 %v1842, %v1779
        %v1891 = vmax.f32 %v1843, %v1860
        %v1892 = vmax.f32 %v1844, %v1781
        %v1893 = vmax.f32 %v1845, %v1861
        %v1894 = vld [vmem:[%s1425] sm:$0xff]
        %v1895 = vld [vmem:[%s1425 + $0x8] sm:$0xff]
        %v1896 = vld [vmem:[%s1425 + $0x18] sm:$0xff]
        %v1897 = vld [vmem:[%s1425 + $0x20] sm:$0xff]
        %v1898 = vld [vmem:[%s1425 + $0x30] sm:$0xff]
        %v1899 = vld [vmem:[%s1425 + $0x38] sm:$0xff]
        %v1900 = vld [vmem:[%s1425 + $0x48] sm:$0xff]
        %v1901 = vld [vmem:[%s1425 + $0x50] sm:$0xff]
        %v1902 = vld [vmem:[%s1425 + $0x60] sm:$0xff]
        %v1903 = vld [vmem:[%s1425 + $0x68] sm:$0xff]
        %v1904 = vld [vmem:[%s1425 + $0x78] sm:$0xff]
        %v1905 = vld [vmem:[%s1425 + $0x80] sm:$0xff]
        %v1906 = vld [vmem:[%s1425 + $0x90] sm:$0xff]
        %v1907 = vld [vmem:[%s1425 + $0x98] sm:$0xff]
        %v1908 = vld [vmem:[%s1425 + $0xa8] sm:$0xff]
        %v1909 = vld [vmem:[%s1425 + $0xb0] sm:$0xff]
        %v1910 = vld [vmem:[%s1425 + $0xc0] sm:$0xff]
        %v1911 = vld [vmem:[%s1425 + $0xc8] sm:$0xff]
        %v1912 = vld [vmem:[%s1425 + $0xd8] sm:$0xff]
        %v1913 = vld [vmem:[%s1425 + $0xe0] sm:$0xff]
        %v1914 = vld [vmem:[%s1425 + $0xf0] sm:$0xff]
        %v1915 = vld [vmem:[%s1425 + $0xf8] sm:$0xff]
        %v1916 = vld [vmem:[%s1425 + $0x108] sm:$0xff]
        %v1917 = vld [vmem:[%s1425 + $0x110] sm:$0xff]
        %v1918 = vld [vmem:[%s1425 + $0x120] sm:$0xff]
        %v1919 = vld [vmem:[%s1425 + $0x128] sm:$0xff]
        %v1920 = vld [vmem:[%s1425 + $0x138] sm:$0xff]
        %v1921 = vld [vmem:[%s1425 + $0x140] sm:$0xff]
        %v1922 = vld [vmem:[%s1425 + $0x150] sm:$0xff]
        %v1923 = vld [vmem:[%s1425 + $0x158] sm:$0xff]
        %v1924 = vld [vmem:[%s1425 + $0x168] sm:$0xff]
        %v1925 = vld [vmem:[%s1425 + $0x170] sm:$0xff]
        %v1926 = vmax.f32 %v1862, %v1894
        %v1927 = vmax.f32 %v1863, %v1895
        %v1928 = vmax.f32 %v1864, %v1896
        %v1929 = vmax.f32 %v1865, %v1897
        %v1930 = vmax.f32 %v1866, %v1898
        %v1931 = vmax.f32 %v1867, %v1899
        %v1932 = vmax.f32 %v1868, %v1900
        %v1933 = vmax.f32 %v1869, %v1901
        %v1934 = vmax.f32 %v1870, %v1902
        %v1935 = vmax.f32 %v1871, %v1903
        %v1936 = vmax.f32 %v1872, %v1904
        %v1937 = vmax.f32 %v1873, %v1905
        %v1938 = vmax.f32 %v1874, %v1906
        %v1939 = vmax.f32 %v1875, %v1907
        %v1940 = vmax.f32 %v1876, %v1908
        %v1941 = vmax.f32 %v1877, %v1909
        %v1942 = vmax.f32 %v1878, %v1910
        %v1943 = vmax.f32 %v1879, %v1911
        %v1944 = vmax.f32 %v1880, %v1912
        %v1945 = vmax.f32 %v1881, %v1913
        %v1946 = vmax.f32 %v1882, %v1914
        %v1947 = vmax.f32 %v1883, %v1915
        %v1948 = vmax.f32 %v1884, %v1916
        %v1949 = vmax.f32 %v1885, %v1917
        %v1950 = vmax.f32 %v1886, %v1918
        %v1951 = vmax.f32 %v1887, %v1919
        %v1952 = vmax.f32 %v1888, %v1920
        %v1953 = vmax.f32 %v1889, %v1921
        %v1954 = vmax.f32 %v1890, %v1922
        %v1955 = vmax.f32 %v1891, %v1923
        %v1956 = vmax.f32 %v1892, %v1924
        %v1957 = vmax.f32 %v1893, %v1925
        %v1958 = vld [vmem:[%s1425 + $0x4] sm:$0xff]
        %v1959 = vld [vmem:[%s1425 + $0xc] sm:$0xff]
        %v1960 = vld [vmem:[%s1425 + $0x1c] sm:$0xff]
        %v1961 = vld [vmem:[%s1425 + $0x24] sm:$0xff]
        %v1962 = vld [vmem:[%s1425 + $0x34] sm:$0xff]
        %v1963 = vld [vmem:[%s1425 + $0x3c] sm:$0xff]
        %v1964 = vld [vmem:[%s1425 + $0x4c] sm:$0xff]
        %v1965 = vld [vmem:[%s1425 + $0x54] sm:$0xff]
        %v1966 = vld [vmem:[%s1425 + $0x64] sm:$0xff]
        %v1967 = vld [vmem:[%s1425 + $0x6c] sm:$0xff]
        %v1968 = vld [vmem:[%s1425 + $0x7c] sm:$0xff]
        %v1969 = vld [vmem:[%s1425 + $0x84] sm:$0xff]
        %v1970 = vld [vmem:[%s1425 + $0x94] sm:$0xff]
        %v1971 = vld [vmem:[%s1425 + $0x9c] sm:$0xff]
        %v1972 = vld [vmem:[%s1425 + $0xac] sm:$0xff]
        %v1973 = vld [vmem:[%s1425 + $0xb4] sm:$0xff]
        %v1974 = vld [vmem:[%s1425 + $0xc4] sm:$0xff]
        %v1975 = vld [vmem:[%s1425 + $0xcc] sm:$0xff]
        %v1976 = vld [vmem:[%s1425 + $0xdc] sm:$0xff]
        %v1977 = vld [vmem:[%s1425 + $0xe4] sm:$0xff]
        %v1978 = vld [vmem:[%s1425 + $0xf4] sm:$0xff]
        %v1979 = vld [vmem:[%s1425 + $0xfc] sm:$0xff]
        %v1980 = vld [vmem:[%s1425 + $0x10c] sm:$0xff]
        %v1981 = vld [vmem:[%s1425 + $0x114] sm:$0xff]
        %v1982 = vld [vmem:[%s1425 + $0x124] sm:$0xff]
        %v1983 = vld [vmem:[%s1425 + $0x12c] sm:$0xff]
        %v1984 = vld [vmem:[%s1425 + $0x13c] sm:$0xff]
        %v1985 = vld [vmem:[%s1425 + $0x144] sm:$0xff]
        %v1986 = vld [vmem:[%s1425 + $0x154] sm:$0xff]
        %v1987 = vld [vmem:[%s1425 + $0x15c] sm:$0xff]
        %v1988 = vld [vmem:[%s1425 + $0x16c] sm:$0xff]
        %v1989 = vld [vmem:[%s1425 + $0x174] sm:$0xff]
        %v1990 = vmax.f32 %v1926, %v1958
        %v1991 = vmax.f32 %v1927, %v1959
        %v1992 = vmax.f32 %v1928, %v1960
        %v1993 = vmax.f32 %v1929, %v1961
        %v1994 = vmax.f32 %v1930, %v1962
        %v1995 = vmax.f32 %v1931, %v1963
        %v1996 = vmax.f32 %v1932, %v1964
        %v1997 = vmax.f32 %v1933, %v1965
        %v1998 = vmax.f32 %v1934, %v1966
        %v1999 = vmax.f32 %v1935, %v1967
        %v2000 = vmax.f32 %v1936, %v1968
        %v2001 = vmax.f32 %v1937, %v1969
        %v2002 = vmax.f32 %v1938, %v1970
        %v2003 = vmax.f32 %v1939, %v1971
        %v2004 = vmax.f32 %v1940, %v1972
        %v2005 = vmax.f32 %v1941, %v1973
        %v2006 = vmax.f32 %v1942, %v1974
        %v2007 = vmax.f32 %v1943, %v1975
        %v2008 = vmax.f32 %v1944, %v1976
        %v2009 = vmax.f32 %v1945, %v1977
        %v2010 = vmax.f32 %v1946, %v1978
        %v2011 = vmax.f32 %v1947, %v1979
        %v2012 = vmax.f32 %v1948, %v1980
        %v2013 = vmax.f32 %v1949, %v1981
        %v2014 = vmax.f32 %v1950, %v1982
        %v2015 = vmax.f32 %v1951, %v1983
        %v2016 = vmax.f32 %v1952, %v1984
        %v2017 = vmax.f32 %v1953, %v1985
        %v2018 = vmax.f32 %v1954, %v1986
        %v2019 = vmax.f32 %v1955, %v1987
        %v2020 = vmax.f32 %v1956, %v1988
        %v2021 = vmax.f32 %v1957, %v1989
        %v2022 = vld [vmem:[%s1425 + $0x10] sm:$0xff]
        %v2023 = vld [vmem:[%s1425 + $0x28] sm:$0xff]
        %v2024 = vld [vmem:[%s1425 + $0x40] sm:$0xff]
        %v2025 = vld [vmem:[%s1425 + $0x58] sm:$0xff]
        %v2026 = vld [vmem:[%s1425 + $0x70] sm:$0xff]
        %v2027 = vld [vmem:[%s1425 + $0x88] sm:$0xff]
        %v2028 = vld [vmem:[%s1425 + $0xa0] sm:$0xff]
        %v2029 = vld [vmem:[%s1425 + $0xb8] sm:$0xff]
        %v2030 = vld [vmem:[%s1425 + $0xd0] sm:$0xff]
        %v2031 = vld [vmem:[%s1425 + $0xe8] sm:$0xff]
        %v2032 = vld [vmem:[%s1425 + $0x100] sm:$0xff]
        %v2033 = vld [vmem:[%s1425 + $0x118] sm:$0xff]
        %v2034 = vld [vmem:[%s1425 + $0x130] sm:$0xff]
        %v2035 = vld [vmem:[%s1425 + $0x148] sm:$0xff]
        %v2036 = vld [vmem:[%s1425 + $0x160] sm:$0xff]
        %v2037 = vld [vmem:[%s1425 + $0x178] sm:$0xff]
        %v2038 = vmax.f32 %v1990, %v1895
        %v2039 = vmax.f32 %v1991, %v2022
        %v2040 = vmax.f32 %v1992, %v1897
        %v2041 = vmax.f32 %v1993, %v2023
        %v2042 = vmax.f32 %v1994, %v1899
        %v2043 = vmax.f32 %v1995, %v2024
        %v2044 = vmax.f32 %v1996, %v1901
        %v2045 = vmax.f32 %v1997, %v2025
        %v2046 = vmax.f32 %v1998, %v1903
        %v2047 = vmax.f32 %v1999, %v2026
        %v2048 = vmax.f32 %v2000, %v1905
        %v2049 = vmax.f32 %v2001, %v2027
        %v2050 = vmax.f32 %v2002, %v1907
        %v2051 = vmax.f32 %v2003, %v2028
        %v2052 = vmax.f32 %v2004, %v1909
        %v2053 = vmax.f32 %v2005, %v2029
        %v2054 = vmax.f32 %v2006, %v1911
        %v2055 = vmax.f32 %v2007, %v2030
        %v2056 = vmax.f32 %v2008, %v1913
        %v2057 = vmax.f32 %v2009, %v2031
        %v2058 = vmax.f32 %v2010, %v1915
        %v2059 = vmax.f32 %v2011, %v2032
        %v2060 = vmax.f32 %v2012, %v1917
        %v2061 = vmax.f32 %v2013, %v2033
        %v2062 = vmax.f32 %v2014, %v1919
        %v2063 = vmax.f32 %v2015, %v2034
        %v2064 = vmax.f32 %v2016, %v1921
        %v2065 = vmax.f32 %v2017, %v2035
        %v2066 = vmax.f32 %v2018, %v1923
        %v2067 = vmax.f32 %v2019, %v2036
        %v2068 = vmax.f32 %v2020, %v1925
        %v2069 = vmax.f32 %v2021, %v2037
        %s2070 = scalar_lea.vmem [#allocation4], 192
        %v2071 = vld [vmem:[%s2070] sm:$0xff]
        %v2072 = vld [vmem:[%s2070 + $0x8] sm:$0xff]
        %v2073 = vld [vmem:[%s2070 + $0x18] sm:$0xff]
        %v2074 = vld [vmem:[%s2070 + $0x20] sm:$0xff]
        %v2075 = vld [vmem:[%s2070 + $0x30] sm:$0xff]
        %v2076 = vld [vmem:[%s2070 + $0x38] sm:$0xff]
        %v2077 = vld [vmem:[%s2070 + $0x48] sm:$0xff]
        %v2078 = vld [vmem:[%s2070 + $0x50] sm:$0xff]
        %v2079 = vld [vmem:[%s2070 + $0x60] sm:$0xff]
        %v2080 = vld [vmem:[%s2070 + $0x68] sm:$0xff]
        %v2081 = vld [vmem:[%s2070 + $0x78] sm:$0xff]
        %v2082 = vld [vmem:[%s2070 + $0x80] sm:$0xff]
        %v2083 = vld [vmem:[%s2070 + $0x90] sm:$0xff]
        %v2084 = vld [vmem:[%s2070 + $0x98] sm:$0xff]
        %v2085 = vld [vmem:[%s2070 + $0xa8] sm:$0xff]
        %v2086 = vld [vmem:[%s2070 + $0xb0] sm:$0xff]
        %v2087 = vld [vmem:[%s2070 + $0xc0] sm:$0xff]
        %v2088 = vld [vmem:[%s2070 + $0xc8] sm:$0xff]
        %v2089 = vld [vmem:[%s2070 + $0xd8] sm:$0xff]
        %v2090 = vld [vmem:[%s2070 + $0xe0] sm:$0xff]
        %v2091 = vld [vmem:[%s2070 + $0xf0] sm:$0xff]
        %v2092 = vld [vmem:[%s2070 + $0xf8] sm:$0xff]
        %v2093 = vld [vmem:[%s2070 + $0x108] sm:$0xff]
        %v2094 = vld [vmem:[%s2070 + $0x110] sm:$0xff]
        %v2095 = vld [vmem:[%s2070 + $0x120] sm:$0xff]
        %v2096 = vld [vmem:[%s2070 + $0x128] sm:$0xff]
        %v2097 = vld [vmem:[%s2070 + $0x138] sm:$0xff]
        %v2098 = vld [vmem:[%s2070 + $0x140] sm:$0xff]
        %v2099 = vld [vmem:[%s2070 + $0x150] sm:$0xff]
        %v2100 = vld [vmem:[%s2070 + $0x158] sm:$0xff]
        %v2101 = vld [vmem:[%s2070 + $0x168] sm:$0xff]
        %v2102 = vld [vmem:[%s2070 + $0x170] sm:$0xff]
        %v2103 = vmax.f32 %v2038, %v2071
        %v2104 = vmax.f32 %v2039, %v2072
        %v2105 = vmax.f32 %v2040, %v2073
        %v2106 = vmax.f32 %v2041, %v2074
        %v2107 = vmax.f32 %v2042, %v2075
        %v2108 = vmax.f32 %v2043, %v2076
        %v2109 = vmax.f32 %v2044, %v2077
        %v2110 = vmax.f32 %v2045, %v2078
        %v2111 = vmax.f32 %v2046, %v2079
        %v2112 = vmax.f32 %v2047, %v2080
        %v2113 = vmax.f32 %v2048, %v2081
        %v2114 = vmax.f32 %v2049, %v2082
        %v2115 = vmax.f32 %v2050, %v2083
        %v2116 = vmax.f32 %v2051, %v2084
        %v2117 = vmax.f32 %v2052, %v2085
        %v2118 = vmax.f32 %v2053, %v2086
        %v2119 = vmax.f32 %v2054, %v2087
        %v2120 = vmax.f32 %v2055, %v2088
        %v2121 = vmax.f32 %v2056, %v2089
        %v2122 = vmax.f32 %v2057, %v2090
        %v2123 = vmax.f32 %v2058, %v2091
        %v2124 = vmax.f32 %v2059, %v2092
        %v2125 = vmax.f32 %v2060, %v2093
        %v2126 = vmax.f32 %v2061, %v2094
        %v2127 = vmax.f32 %v2062, %v2095
        %v2128 = vmax.f32 %v2063, %v2096
        %v2129 = vmax.f32 %v2064, %v2097
        %v2130 = vmax.f32 %v2065, %v2098
        %v2131 = vmax.f32 %v2066, %v2099
        %v2132 = vmax.f32 %v2067, %v2100
        %v2133 = vmax.f32 %v2068, %v2101
        %v2134 = vmax.f32 %v2069, %v2102
        %v2135 = vld [vmem:[%s2070 + $0x4] sm:$0xff]
        %v2136 = vld [vmem:[%s2070 + $0xc] sm:$0xff]
        %v2137 = vld [vmem:[%s2070 + $0x1c] sm:$0xff]
        %v2138 = vld [vmem:[%s2070 + $0x24] sm:$0xff]
        %v2139 = vld [vmem:[%s2070 + $0x34] sm:$0xff]
        %v2140 = vld [vmem:[%s2070 + $0x3c] sm:$0xff]
        %v2141 = vld [vmem:[%s2070 + $0x4c] sm:$0xff]
        %v2142 = vld [vmem:[%s2070 + $0x54] sm:$0xff]
        %v2143 = vld [vmem:[%s2070 + $0x64] sm:$0xff]
        %v2144 = vld [vmem:[%s2070 + $0x6c] sm:$0xff]
        %v2145 = vld [vmem:[%s2070 + $0x7c] sm:$0xff]
        %v2146 = vld [vmem:[%s2070 + $0x84] sm:$0xff]
        %v2147 = vld [vmem:[%s2070 + $0x94] sm:$0xff]
        %v2148 = vld [vmem:[%s2070 + $0x9c] sm:$0xff]
        %v2149 = vld [vmem:[%s2070 + $0xac] sm:$0xff]
        %v2150 = vld [vmem:[%s2070 + $0xb4] sm:$0xff]
        %v2151 = vld [vmem:[%s2070 + $0xc4] sm:$0xff]
        %v2152 = vld [vmem:[%s2070 + $0xcc] sm:$0xff]
        %v2153 = vld [vmem:[%s2070 + $0xdc] sm:$0xff]
        %v2154 = vld [vmem:[%s2070 + $0xe4] sm:$0xff]
        %v2155 = vld [vmem:[%s2070 + $0xf4] sm:$0xff]
        %v2156 = vld [vmem:[%s2070 + $0xfc] sm:$0xff]
        %v2157 = vld [vmem:[%s2070 + $0x10c] sm:$0xff]
        %v2158 = vld [vmem:[%s2070 + $0x114] sm:$0xff]
        %v2159 = vld [vmem:[%s2070 + $0x124] sm:$0xff]
        %v2160 = vld [vmem:[%s2070 + $0x12c] sm:$0xff]
        %v2161 = vld [vmem:[%s2070 + $0x13c] sm:$0xff]
        %v2162 = vld [vmem:[%s2070 + $0x144] sm:$0xff]
        %v2163 = vld [vmem:[%s2070 + $0x154] sm:$0xff]
        %v2164 = vld [vmem:[%s2070 + $0x15c] sm:$0xff]
        %v2165 = vld [vmem:[%s2070 + $0x16c] sm:$0xff]
        %v2166 = vld [vmem:[%s2070 + $0x174] sm:$0xff]
        %v2167 = vmax.f32 %v2103, %v2135
        %v2168 = vmax.f32 %v2104, %v2136
        %v2169 = vmax.f32 %v2105, %v2137
        %v2170 = vmax.f32 %v2106, %v2138
        %v2171 = vmax.f32 %v2107, %v2139
        %v2172 = vmax.f32 %v2108, %v2140
        %v2173 = vmax.f32 %v2109, %v2141
        %v2174 = vmax.f32 %v2110, %v2142
        %v2175 = vmax.f32 %v2111, %v2143
        %v2176 = vmax.f32 %v2112, %v2144
        %v2177 = vmax.f32 %v2113, %v2145
        %v2178 = vmax.f32 %v2114, %v2146
        %v2179 = vmax.f32 %v2115, %v2147
        %v2180 = vmax.f32 %v2116, %v2148
        %v2181 = vmax.f32 %v2117, %v2149
        %v2182 = vmax.f32 %v2118, %v2150
        %v2183 = vmax.f32 %v2119, %v2151
        %v2184 = vmax.f32 %v2120, %v2152
        %v2185 = vmax.f32 %v2121, %v2153
        %v2186 = vmax.f32 %v2122, %v2154
        %v2187 = vmax.f32 %v2123, %v2155
        %v2188 = vmax.f32 %v2124, %v2156
        %v2189 = vmax.f32 %v2125, %v2157
        %v2190 = vmax.f32 %v2126, %v2158
        %v2191 = vmax.f32 %v2127, %v2159
        %v2192 = vmax.f32 %v2128, %v2160
        %v2193 = vmax.f32 %v2129, %v2161
        %v2194 = vmax.f32 %v2130, %v2162
        %v2195 = vmax.f32 %v2131, %v2163
        %v2196 = vmax.f32 %v2132, %v2164
        %v2197 = vmax.f32 %v2133, %v2165
        %v2198 = vmax.f32 %v2134, %v2166
        %v2199 = vld [vmem:[%s2070 + $0x10] sm:$0xff]
        %v2200 = vld [vmem:[%s2070 + $0x28] sm:$0xff]
        %v2201 = vld [vmem:[%s2070 + $0x40] sm:$0xff]
        %v2202 = vld [vmem:[%s2070 + $0x58] sm:$0xff]
        %v2203 = vld [vmem:[%s2070 + $0x70] sm:$0xff]
        %v2204 = vld [vmem:[%s2070 + $0x88] sm:$0xff]
        %v2205 = vld [vmem:[%s2070 + $0xa0] sm:$0xff]
        %v2206 = vld [vmem:[%s2070 + $0xb8] sm:$0xff]
        %v2207 = vld [vmem:[%s2070 + $0xd0] sm:$0xff]
        %v2208 = vld [vmem:[%s2070 + $0xe8] sm:$0xff]
        %v2209 = vld [vmem:[%s2070 + $0x100] sm:$0xff]
        %v2210 = vld [vmem:[%s2070 + $0x118] sm:$0xff]
        %v2211 = vld [vmem:[%s2070 + $0x130] sm:$0xff]
        %v2212 = vld [vmem:[%s2070 + $0x148] sm:$0xff]
        %v2213 = vld [vmem:[%s2070 + $0x160] sm:$0xff]
        %v2214 = vld [vmem:[%s2070 + $0x178] sm:$0xff]
        %v2215 = vmax.f32 %v2167, %v2072
        %v2216 = vmax.f32 %v2168, %v2199
        %v2217 = vmax.f32 %v2169, %v2074
        %v2218 = vmax.f32 %v2170, %v2200
        %v2219 = vmax.f32 %v2171, %v2076
        %v2220 = vmax.f32 %v2172, %v2201
        %v2221 = vmax.f32 %v2173, %v2078
        %v2222 = vmax.f32 %v2174, %v2202
        %v2223 = vmax.f32 %v2175, %v2080
        %v2224 = vmax.f32 %v2176, %v2203
        %v2225 = vmax.f32 %v2177, %v2082
        %v2226 = vmax.f32 %v2178, %v2204
        %v2227 = vmax.f32 %v2179, %v2084
        %v2228 = vmax.f32 %v2180, %v2205
        %v2229 = vmax.f32 %v2181, %v2086
        %v2230 = vmax.f32 %v2182, %v2206
        %v2231 = vmax.f32 %v2183, %v2088
        %v2232 = vmax.f32 %v2184, %v2207
        %v2233 = vmax.f32 %v2185, %v2090
        %v2234 = vmax.f32 %v2186, %v2208
        %v2235 = vmax.f32 %v2187, %v2092
        %v2236 = vmax.f32 %v2188, %v2209
        %v2237 = vmax.f32 %v2189, %v2094
        %v2238 = vmax.f32 %v2190, %v2210
        %v2239 = vmax.f32 %v2191, %v2096
        %v2240 = vmax.f32 %v2192, %v2211
        %v2241 = vmax.f32 %v2193, %v2098
        %v2242 = vmax.f32 %v2194, %v2212
        %v2243 = vmax.f32 %v2195, %v2100
        %v2244 = vmax.f32 %v2196, %v2213
        %v2245 = vmax.f32 %v2197, %v2102
        %v2246 = vmax.f32 %v2198, %v2214
        %2247 = vst [vmem:[%s153] sm:$0xff] %v2215
        %2248 = vst [vmem:[%s153 + $0x8] sm:$0xff] %v2216
        %2249 = vst [vmem:[%s153 + $0x10] sm:$0xff] %v2217
        %2250 = vst [vmem:[%s153 + $0x18] sm:$0xff] %v2218
        %2251 = vst [vmem:[%s153 + $0x20] sm:$0xff] %v2219
        %2252 = vst [vmem:[%s153 + $0x28] sm:$0xff] %v2220
        %2253 = vst [vmem:[%s153 + $0x30] sm:$0xff] %v2221
        %2254 = vst [vmem:[%s153 + $0x38] sm:$0xff] %v2222
        %2255 = vst [vmem:[%s153 + $0x40] sm:$0xff] %v2223
        %2256 = vst [vmem:[%s153 + $0x48] sm:$0xff] %v2224
        %2257 = vst [vmem:[%s153 + $0x50] sm:$0xff] %v2225
        %2258 = vst [vmem:[%s153 + $0x58] sm:$0xff] %v2226
        %2259 = vst [vmem:[%s153 + $0x60] sm:$0xff] %v2227
        %2260 = vst [vmem:[%s153 + $0x68] sm:$0xff] %v2228
        %2261 = vst [vmem:[%s153 + $0x70] sm:$0xff] %v2229
        %2262 = vst [vmem:[%s153 + $0x78] sm:$0xff] %v2230
        %2263 = vst [vmem:[%s153 + $0x80] sm:$0xff] %v2231
        %2264 = vst [vmem:[%s153 + $0x88] sm:$0xff] %v2232
        %2265 = vst [vmem:[%s153 + $0x90] sm:$0xff] %v2233
        %2266 = vst [vmem:[%s153 + $0x98] sm:$0xff] %v2234
        %2267 = vst [vmem:[%s153 + $0xa0] sm:$0xff] %v2235
        %2268 = vst [vmem:[%s153 + $0xa8] sm:$0xff] %v2236
        %2269 = vst [vmem:[%s153 + $0xb0] sm:$0xff] %v2237
        %2270 = vst [vmem:[%s153 + $0xb8] sm:$0xff] %v2238
        %2271 = vst [vmem:[%s153 + $0xc0] sm:$0xff] %v2239
        %2272 = vst [vmem:[%s153 + $0xc8] sm:$0xff] %v2240
        %2273 = vst [vmem:[%s153 + $0xd0] sm:$0xff] %v2241
        %2274 = vst [vmem:[%s153 + $0xd8] sm:$0xff] %v2242
        %2275 = vst [vmem:[%s153 + $0xe0] sm:$0xff] %v2243
        %2276 = vst [vmem:[%s153 + $0xe8] sm:$0xff] %v2244
        %2277 = vst [vmem:[%s153 + $0xf0] sm:$0xff] %v2245
        %2278 = vst [vmem:[%s153 + $0xf8] sm:$0xff] %v2246
        %s2279 = scalar_lea.vmem %s153, 768 [#allocation8]
        %2280 = vst [vmem:[%s2279] sm:$0xff] %v227
        %2281 = vst [vmem:[%s2279 + $0x8] sm:$0xff] %v228
        %2282 = vst [vmem:[%s2279 + $0x10] sm:$0xff] %v229
        %2283 = vst [vmem:[%s2279 + $0x18] sm:$0xff] %v230
        %2284 = vst [vmem:[%s2279 + $0x20] sm:$0xff] %v231
        %2285 = vst [vmem:[%s2279 + $0x28] sm:$0xff] %v232
        %2286 = vst [vmem:[%s2279 + $0x30] sm:$0xff] %v233
        %2287 = vst [vmem:[%s2279 + $0x38] sm:$0xff] %v234
        %2288 = vst [vmem:[%s2279 + $0x40] sm:$0xff] %v235
        %2289 = vst [vmem:[%s2279 + $0x48] sm:$0xff] %v236
        %2290 = vst [vmem:[%s2279 + $0x50] sm:$0xff] %v237
        %2291 = vst [vmem:[%s2279 + $0x58] sm:$0xff] %v238
        %2292 = vst [vmem:[%s2279 + $0x60] sm:$0xff] %v239
        %2293 = vst [vmem:[%s2279 + $0x68] sm:$0xff] %v240
        %2294 = vst [vmem:[%s2279 + $0x70] sm:$0xff] %v241
        %2295 = vst [vmem:[%s2279 + $0x78] sm:$0xff] %v242
        %2296 = vst [vmem:[%s2279 + $0x80] sm:$0xff] %v243
        %2297 = vst [vmem:[%s2279 + $0x88] sm:$0xff] %v244
        %2298 = vst [vmem:[%s2279 + $0x90] sm:$0xff] %v245
        %2299 = vst [vmem:[%s2279 + $0x98] sm:$0xff] %v246
        %2300 = vst [vmem:[%s2279 + $0xa0] sm:$0xff] %v247
        %2301 = vst [vmem:[%s2279 + $0xa8] sm:$0xff] %v248
        %2302 = vst [vmem:[%s2279 + $0xb0] sm:$0xff] %v249
        %2303 = vst [vmem:[%s2279 + $0xb8] sm:$0xff] %v250
        %2304 = vst [vmem:[%s2279 + $0xc0] sm:$0xff] %v251
        %2305 = vst [vmem:[%s2279 + $0xc8] sm:$0xff] %v252
        %2306 = vst [vmem:[%s2279 + $0xd0] sm:$0xff] %v253
        %2307 = vst [vmem:[%s2279 + $0xd8] sm:$0xff] %v254
        %2308 = vst [vmem:[%s2279 + $0xe0] sm:$0xff] %v255
        %2309 = vst [vmem:[%s2279 + $0xe8] sm:$0xff] %v256
        %2310 = vst [vmem:[%s2279 + $0xf0] sm:$0xff] %v257
        %2311 = vst [vmem:[%s2279 + $0xf8] sm:$0xff] %v258
        %s2312 = sand.u32 %s68, 1
        %s2313 = scalar_lea.sflag [#allocation7], %s2312
        %s2314 = sand.u32 %s68, 1
        %s2315 = smul.addr %s2314, 1024
        %s2316 = scalar_lea.vmem [#allocation8], %s2315
        // Predicated region
        $region33: #{tpu_custom_call.1} parent=23 // pred_check
          %p2317 = pneg %p78
        $region34: #{tpu_custom_call.1} parent=23 // pred_check_branch
          %2319 = sbr.rel (%p2317) target = $region36
        $region35: #{tpu_custom_call.1} parent=23 // pred_region
          %2321 = vsyncadd %s2313, 0
          %s2322 = smul.addr %s23, 128
          %s2323 = sadd.s32 %s22, %s2322
          %s2324 = smul.addr %s2323, 8
          %s2325 = scalar_lea.hbm %s1, %s2324
          %s2326 = sshll.u32 %s2316, 4
          %s2327 = int_to_ptr.vmem [resolvable:$true] %s2326
          %s2328 = sshll.u32 %s2325, 4
          %s2329 = int_to_ptr.hbm [resolvable:$true] %s2328
          %2334 = dma.vmem_to_hbm [thread:$0]  %s2327, 16384, %s2329, %s2313, 128, 128, 8
        $region36: #{tpu_custom_call.1} parent=23 // pred_fallthru
          _
      $region24: #{tpu_custom_call.1} parent=5 // pred_fallthru
        _
      %p2335 = scmp.le.s32.totalorder 2, %s13
      // Predicated region
      $region37: #{tpu_custom_call.1} parent=5 // pred_check
        %p2336 = pneg %p2335
      $region38: #{tpu_custom_call.1} parent=5 // pred_check_branch
        %2338 = sbr.rel (%p2336) target = $region40
      $region39: #{tpu_custom_call.1} parent=5 // pred_region
        %s2339 = ssub.s32 %s13, 2
        // Predicated region
        $region41: #{tpu_custom_call.1} parent=39 // pred_check
          %p2340 = pneg %p84
        $region42: #{tpu_custom_call.1} parent=39 // pred_check_branch
          %2342 = sbr.rel (%p2340) target = $region44
        $region43: #{tpu_custom_call.1} parent=39 // pred_region
          %s2343 = sand.u32 %s69, 1
          %s2344 = scalar_lea.sflag [#allocation7], %s2343
          %s2345 = sand.u32 %s69, 1
          %s2346 = smul.addr %s2345, 1024
          %s2347 = scalar_lea.vmem [#allocation8], %s2346
          %2349 = dma.done %s2344, 16384
        $region44: #{tpu_custom_call.1} parent=39 // pred_fallthru
          _
      $region40: #{tpu_custom_call.1} parent=5 // pred_fallthru
        _
    $region6: #{tpu_custom_call.1} parent=1 // loop_footer
      %s17 = sadd.s32 1, %s13
    $region7: #{tpu_custom_call.1} parent=1 // loop_footer_branch
      %12 = sbr.rel target = $region3
    $region8: #{tpu_custom_call.1} parent=1 // loop_exit
      _
    %2350 = vsyncpa [#allocation6], 1
    %s2351 = scalar_lea.sflag [#allocation6], 1
    %2352 = vsyncpa %s2351, 1
    %2353 = vsyncpa [#allocation7], 1
    %s2354 = scalar_lea.sflag [#allocation7], 1
    %2355 = vsyncpa %s2354, 1

</llo_original>
